<compile_context>
chip_gen: v7x
topology: tpu7x:2x2x1
jax: 0.10.0
libtpu: 0.0.40
codegen_flags: <defaults>
</compile_context>

<pallas_src>
import functools

import jax
import jax.numpy as jnp
from jax.experimental import pallas as pl
from jax.experimental.pallas import tpu as pltpu

KSIZE = 7
PAD = KSIZE // 2
NACC = 4        # independent conv accumulators (break the serial add chain)
CCHUNK = 128    # channel chunk for x2-free stats / chunked output stores


def _cbam_fused_kernel(x_ref, w1_ref, w2_ref, wsp_ref, out_ref, *, H, W):
    Bb, C, HW = x_ref.shape
    wsp = wsp_ref[...]                                       # (2, 49) f32, VMEM, read once

    # Per-kj output-column validity masks (shared by all images in the block).
    lane = jax.lax.broadcasted_iota(jnp.int32, (1, HW), 1)
    col = lane % W
    col_ok = [(col + (kj - PAD) >= 0) & (col + (kj - PAD) < W)
              for kj in range(KSIZE)]

    zcol = jnp.zeros((2, PAD), jnp.float32)
    zrow = jnp.zeros((2, PAD * W), jnp.float32)

    for b in range(Bb):
        x = x_ref[b]                                         # (C, HW) f32, lane-dense

        # ---------------- Channel attention (MLP on pooled stats) ----------------
        avg = jnp.sum(x, axis=1, keepdims=True) * (1.0 / HW)            # (C, 1)
        mx = jnp.max(x, axis=1, keepdims=True)                          # (C, 1)
        pooled = jnp.concatenate([avg, mx], axis=1)                     # (C, 2)
        h = jnp.maximum(
            jnp.dot(w1_ref[...], pooled, preferred_element_type=jnp.float32), 0.0)
        o = jnp.dot(w2_ref[...], h, preferred_element_type=jnp.float32)  # (C, 2)
        ca = jax.nn.sigmoid(o[:, 0:1] + o[:, 1:2])                       # (C, 1)

        # -------- Channel-pooled maps WITHOUT materializing x2 = ca*x ----------
        ssum = jnp.zeros((1, HW), jnp.float32)
        smax = jnp.full((1, HW), -jnp.inf, jnp.float32)
        for c0 in range(0, C, CCHUNK):
            prod = ca[c0:c0 + CCHUNK] * x[c0:c0 + CCHUNK]    # (<=CCHUNK, HW) temp only
            ssum = ssum + jnp.sum(prod, axis=0, keepdims=True)
            smax = jnp.maximum(smax, jnp.max(prod, axis=0, keepdims=True))
        maps = jnp.concatenate([ssum * (1.0 / C), smax], axis=0)        # (2, HW) [mean, max]

        # -------- 7x7 'same' conv, both channels packed in the sublane dim -------
        # Column shift + mask once per kj (7 selects total); after that every
        # (ki, kj) tap is a plain static lane slice of a zero-row-extended map.
        mpad = jnp.concatenate([zcol, maps, zcol], axis=1)               # (2, HW + 2*PAD)
        big = []
        for kj in range(KSIZE):
            shifted = mpad[:, kj:kj + HW]                                # col shift by kj-PAD
            masked = jnp.where(col_ok[kj], shifted, 0.0)
            big.append(jnp.concatenate([zrow, masked, zrow], axis=1))    # (2, HW + 2*PAD*W)

        accs = [jnp.zeros((2, HW), jnp.float32) for _ in range(NACC)]
        for ki in range(KSIZE):
            row_start = ki * W                                           # = PAD*W + (ki-PAD)*W
            for kj in range(KSIZE):
                t = ki * KSIZE + kj
                w_t = wsp[:, t:t + 1]                                    # (2, 1) per-channel weight
                tap = big[kj][:, row_start:row_start + HW]               # (2, HW) static lane slice
                accs[t % NACC] = accs[t % NACC] + w_t * tap
        acc = accs[0]
        for a in accs[1:]:
            acc = acc + a
        sa = jax.nn.sigmoid(acc[0:1] + acc[1:2])                         # (1, HW)

        # ------------- Final rescale, written per channel-chunk ------------------
        for c0 in range(0, C, CCHUNK):
            cc = min(CCHUNK, C - c0)
            out_ref[b, c0:c0 + cc, :] = (x[c0:c0 + cc] * ca[c0:c0 + cc]) * sa


def cbam_forward(x, w1, w2, wsp):
    """x: (B, C, H, W) f32; w1: (Cr, C); w2: (C, Cr); wsp: (1, 2, 7, 7)."""
    B, C, H, W = x.shape
    HW = H * W
    Cr = w1.shape[0]
    # NOTE: for best store efficiency HW should be a multiple of 128 (true for
    # the demo shape).  Non-multiple shapes would need wrapper-side lane padding
    # and a re-derived conv row stride.

    x_flat = x.reshape(B, C, HW)                        # contiguous reshape: free
    wsp2d = wsp.reshape(2, KSIZE * KSIZE).astype(jnp.float32)   # (2, 49) -> VMEM

    # Batch Bb images per grid step (~2 MiB blocks) while keeping the parallel
    # grid extent even when possible (v7x: 2 TensorCores).
    per_img = C * HW * 4
    target = 2 * 1024 * 1024
    Bb = max(1, min(B, target // per_img))
    while Bb > 1 and (B % Bb != 0 or (B // Bb) % 2 != 0):
        Bb -= 1
    grid = (B // Bb,)

    bytes_accessed = 2 * B * C * HW * 4 + (Cr * C + C * Cr + 2 * KSIZE * KSIZE) * 4
    flops = B * (3 * C * HW                              # rescales + pooled-map pass
                 + 2 * 2 * KSIZE * KSIZE * HW            # 7x7 conv MACs
                 + 8 * C * Cr                            # channel MLP
                 + 2 * C * HW)                           # channel pools
    cost = pl.CostEstimate(flops=flops,
                           transcendentals=B * (C + HW),
                           bytes_accessed=bytes_accessed)

    out_flat = pl.pallas_call(
        functools.partial(_cbam_fused_kernel, H=H, W=W),
        out_shape=jax.ShapeDtypeStruct((B, C, HW), jnp.float32),
        grid=grid,
        in_specs=[
            pl.BlockSpec((Bb, C, HW), lambda i: (i, 0, 0)),
            pl.BlockSpec((Cr, C), lambda i: (0, 0)),
            pl.BlockSpec((C, Cr), lambda i: (0, 0)),
            pl.BlockSpec((2, KSIZE * KSIZE), lambda i: (0, 0)),
        ],
        out_specs=pl.BlockSpec((Bb, C, HW), lambda i: (i, 0, 0)),
        compiler_params=pltpu.CompilerParams(
            dimension_semantics=("parallel",),
            vmem_limit_bytes=48 * 1024 * 1024,
        ),
        cost_estimate=cost,
    )(x_flat, w1, w2, wsp2d)
    return out_flat.reshape(B, C, H, W)


# --------------------------- Pure-JAX reference ------------------------------
def cbam_reference(x, w1, w2, wsp):
    avg = jnp.mean(x, axis=(2, 3))           # (B, C)
    mx = jnp.max(x, axis=(2, 3))             # (B, C)

    def fc(p):
        h = jnp.maximum(p @ w1.T, 0.0)       # (B, Cr)
        return h @ w2.T                      # (B, C)

    ca = jax.nn.sigmoid(fc(avg) + fc(mx))    # (B, C)
    x2 = x * ca[:, :, None, None]

    smean = jnp.mean(x2, axis=1, keepdims=True)
    smax = jnp.max(x2, axis=1, keepdims=True)
    maps = jnp.concatenate([smean, smax], axis=1)  # (B, 2, H, W)
    sa = jax.lax.conv_general_dilated(
        maps, wsp, (1, 1), [(PAD, PAD), (PAD, PAD)],
        dimension_numbers=("NCHW", "OIHW", "NCHW"))
    sa = jax.nn.sigmoid(sa)                  # (B, 1, H, W)
    return x2 * sa


if __name__ == "__main__":
    B, C, H, W = 2, 32, 16, 16
    ratio = 16
    Cr = C // ratio  # 2

    key = jax.random.PRNGKey(0)
    kx, k1, k2, k3 = jax.random.split(key, 4)
    x = jax.random.normal(kx, (B, C, H, W), jnp.float32)
    w1 = jax.random.normal(k1, (Cr, C), jnp.float32) * 0.1                # Conv2d(C, Cr, 1)
    w2 = jax.random.normal(k2, (C, Cr), jnp.float32) * 0.1                # Conv2d(Cr, C, 1)
    wsp = jax.random.normal(k3, (1, 2, KSIZE, KSIZE), jnp.float32) * 0.1  # Conv2d(2, 1, 7)

    out = jax.block_until_ready(cbam_forward(x, w1, w2, wsp))
    ref = jax.block_until_ready(cbam_reference(x, w1, w2, wsp))

    assert out.shape == (B, C, H, W) and out.dtype == jnp.float32
    assert jnp.allclose(out, ref, rtol=1e-4, atol=1e-4), (
        float(jnp.max(jnp.abs(out - ref))))
    print("KERNEL_OK")
</pallas_src>

<mosaic_0001>
module attributes {stable_mosaic.version = 11 : i64} {
  func.func @_cbam_fused_kernel(%arg0: i32, %arg1: memref<1x32x256xf32, #tpu.memory_space<vmem>>, %arg2: memref<2x32xf32, #tpu.memory_space<vmem>>, %arg3: memref<32x2xf32, #tpu.memory_space<vmem>>, %arg4: memref<2x49xf32, #tpu.memory_space<vmem>>, %arg5: memref<1x32x256xf32, #tpu.memory_space<vmem>>) attributes {dimension_semantics = [#tpu.dimension_semantics<parallel>], iteration_bounds = array<i64: 2>, scalar_prefetch = 0 : i64, scratch_operands = 0 : i64, tpu.core_type = #tpu.core_type<tc>, window_params = [{transform_indices = @transform_0, window_bounds = array<i64: 1, 32, 256>}, {pipeline_mode = #tpu.pipeline_mode<synchronous>, transform_indices = @transform_1, window_bounds = array<i64: 2, 32>}, {pipeline_mode = #tpu.pipeline_mode<synchronous>, transform_indices = @transform_2, window_bounds = array<i64: 32, 2>}, {pipeline_mode = #tpu.pipeline_mode<synchronous>, transform_indices = @transform_3, window_bounds = array<i64: 2, 49>}, {transform_indices = @transform_4, window_bounds = array<i64: 1, 32, 256>}]} {
    %c0 = arith.constant 0 : index
    %c0_0 = arith.constant 0 : index
    %0 = vector.load %arg4[%c0, %c0_0] : memref<2x49xf32, #tpu.memory_space<vmem>>, vector<2x49xf32>
    %1 = tpu.iota {dimensions = array<i32: 1>} : vector<1x256xi32>
    %c16_i32 = arith.constant 16 : i32
    %c0_i32 = arith.constant 0 : i32
    %2 = arith.cmpi eq, %c16_i32, %c0_i32 : i32
    %c1_i32 = arith.constant 1 : i32
    %3 = arith.select %2, %c1_i32, %c16_i32 : i32
    %4 = vector.broadcast %3 : i32 to vector<1x256xi32>
    %5 = arith.remsi %1, %4 : vector<1x256xi32>
    %c0_i32_1 = arith.constant 0 : i32
    %6 = vector.broadcast %c0_i32_1 : i32 to vector<1x256xi32>
    %7 = arith.cmpi ne, %5, %6 : vector<1x256xi32>
    %c0_i32_2 = arith.constant 0 : i32
    %8 = vector.broadcast %c0_i32_2 : i32 to vector<1x256xi32>
    %9 = arith.cmpi slt, %5, %8 : vector<1x256xi32>
    %c0_i32_3 = arith.constant 0 : i32
    %10 = arith.cmpi slt, %3, %c0_i32_3 : i32
    %11 = vector.broadcast %10 : i1 to vector<1x256xi1>
    %12 = vector.broadcast %11 : vector<1x256xi1> to vector<1x256xi1>
    %13 = arith.xori %9, %12 : vector<1x256xi1>
    %14 = arith.andi %13, %7 : vector<1x256xi1>
    %15 = vector.broadcast %3 : i32 to vector<1x256xi32>
    %16 = arith.addi %5, %15 : vector<1x256xi32>
    %17 = arith.select %14, %16, %5 : vector<1x256xi1>, vector<1x256xi32>
    %c-3_i32 = arith.constant -3 : i32
    %18 = vector.broadcast %c-3_i32 : i32 to vector<1x256xi32>
    %19 = arith.addi %17, %18 : vector<1x256xi32>
    %c0_i32_4 = arith.constant 0 : i32
    %20 = vector.broadcast %c0_i32_4 : i32 to vector<1x256xi32>
    %21 = arith.cmpi sge, %19, %20 : vector<1x256xi32>
    %c-3_i32_5 = arith.constant -3 : i32
    %22 = vector.broadcast %c-3_i32_5 : i32 to vector<1x256xi32>
    %23 = arith.addi %17, %22 : vector<1x256xi32>
    %c16_i32_6 = arith.constant 16 : i32
    %24 = vector.broadcast %c16_i32_6 : i32 to vector<1x256xi32>
    %25 = arith.cmpi slt, %23, %24 : vector<1x256xi32>
    %26 = arith.andi %21, %25 : vector<1x256xi1>
    %c-2_i32 = arith.constant -2 : i32
    %27 = vector.broadcast %c-2_i32 : i32 to vector<1x256xi32>
    %28 = arith.addi %17, %27 : vector<1x256xi32>
    %c0_i32_7 = arith.constant 0 : i32
    %29 = vector.broadcast %c0_i32_7 : i32 to vector<1x256xi32>
    %30 = arith.cmpi sge, %28, %29 : vector<1x256xi32>
    %c-2_i32_8 = arith.constant -2 : i32
    %31 = vector.broadcast %c-2_i32_8 : i32 to vector<1x256xi32>
    %32 = arith.addi %17, %31 : vector<1x256xi32>
    %c16_i32_9 = arith.constant 16 : i32
    %33 = vector.broadcast %c16_i32_9 : i32 to vector<1x256xi32>
    %34 = arith.cmpi slt, %32, %33 : vector<1x256xi32>
    %35 = arith.andi %30, %34 : vector<1x256xi1>
    %c-1_i32 = arith.constant -1 : i32
    %36 = vector.broadcast %c-1_i32 : i32 to vector<1x256xi32>
    %37 = arith.addi %17, %36 : vector<1x256xi32>
    %c0_i32_10 = arith.constant 0 : i32
    %38 = vector.broadcast %c0_i32_10 : i32 to vector<1x256xi32>
    %39 = arith.cmpi sge, %37, %38 : vector<1x256xi32>
    %c-1_i32_11 = arith.constant -1 : i32
    %40 = vector.broadcast %c-1_i32_11 : i32 to vector<1x256xi32>
    %41 = arith.addi %17, %40 : vector<1x256xi32>
    %c16_i32_12 = arith.constant 16 : i32
    %42 = vector.broadcast %c16_i32_12 : i32 to vector<1x256xi32>
    %43 = arith.cmpi slt, %41, %42 : vector<1x256xi32>
    %44 = arith.andi %39, %43 : vector<1x256xi1>
    %c0_i32_13 = arith.constant 0 : i32
    %45 = vector.broadcast %c0_i32_13 : i32 to vector<1x256xi32>
    %46 = arith.addi %17, %45 : vector<1x256xi32>
    %c0_i32_14 = arith.constant 0 : i32
    %47 = vector.broadcast %c0_i32_14 : i32 to vector<1x256xi32>
    %48 = arith.cmpi sge, %46, %47 : vector<1x256xi32>
    %c0_i32_15 = arith.constant 0 : i32
    %49 = vector.broadcast %c0_i32_15 : i32 to vector<1x256xi32>
    %50 = arith.addi %17, %49 : vector<1x256xi32>
    %c16_i32_16 = arith.constant 16 : i32
    %51 = vector.broadcast %c16_i32_16 : i32 to vector<1x256xi32>
    %52 = arith.cmpi slt, %50, %51 : vector<1x256xi32>
    %53 = arith.andi %48, %52 : vector<1x256xi1>
    %c1_i32_17 = arith.constant 1 : i32
    %54 = vector.broadcast %c1_i32_17 : i32 to vector<1x256xi32>
    %55 = arith.addi %17, %54 : vector<1x256xi32>
    %c0_i32_18 = arith.constant 0 : i32
    %56 = vector.broadcast %c0_i32_18 : i32 to vector<1x256xi32>
    %57 = arith.cmpi sge, %55, %56 : vector<1x256xi32>
    %c1_i32_19 = arith.constant 1 : i32
    %58 = vector.broadcast %c1_i32_19 : i32 to vector<1x256xi32>
    %59 = arith.addi %17, %58 : vector<1x256xi32>
    %c16_i32_20 = arith.constant 16 : i32
    %60 = vector.broadcast %c16_i32_20 : i32 to vector<1x256xi32>
    %61 = arith.cmpi slt, %59, %60 : vector<1x256xi32>
    %62 = arith.andi %57, %61 : vector<1x256xi1>
    %c2_i32 = arith.constant 2 : i32
    %63 = vector.broadcast %c2_i32 : i32 to vector<1x256xi32>
    %64 = arith.addi %17, %63 : vector<1x256xi32>
    %c0_i32_21 = arith.constant 0 : i32
    %65 = vector.broadcast %c0_i32_21 : i32 to vector<1x256xi32>
    %66 = arith.cmpi sge, %64, %65 : vector<1x256xi32>
    %c2_i32_22 = arith.constant 2 : i32
    %67 = vector.broadcast %c2_i32_22 : i32 to vector<1x256xi32>
    %68 = arith.addi %17, %67 : vector<1x256xi32>
    %c16_i32_23 = arith.constant 16 : i32
    %69 = vector.broadcast %c16_i32_23 : i32 to vector<1x256xi32>
    %70 = arith.cmpi slt, %68, %69 : vector<1x256xi32>
    %71 = arith.andi %66, %70 : vector<1x256xi1>
    %c3_i32 = arith.constant 3 : i32
    %72 = vector.broadcast %c3_i32 : i32 to vector<1x256xi32>
    %73 = arith.addi %17, %72 : vector<1x256xi32>
    %c0_i32_24 = arith.constant 0 : i32
    %74 = vector.broadcast %c0_i32_24 : i32 to vector<1x256xi32>
    %75 = arith.cmpi sge, %73, %74 : vector<1x256xi32>
    %c3_i32_25 = arith.constant 3 : i32
    %76 = vector.broadcast %c3_i32_25 : i32 to vector<1x256xi32>
    %77 = arith.addi %17, %76 : vector<1x256xi32>
    %c16_i32_26 = arith.constant 16 : i32
    %78 = vector.broadcast %c16_i32_26 : i32 to vector<1x256xi32>
    %79 = arith.cmpi slt, %77, %78 : vector<1x256xi32>
    %80 = arith.andi %75, %79 : vector<1x256xi1>
    %cst = arith.constant 0.000000e+00 : f32
    %81 = vector.broadcast %cst : f32 to vector<2x3xf32>
    %cst_27 = arith.constant 0.000000e+00 : f32
    %82 = vector.broadcast %cst_27 : f32 to vector<2x48xf32>
    %c0_28 = arith.constant 0 : index
    %c0_29 = arith.constant 0 : index
    %c0_30 = arith.constant 0 : index
    %83 = vector.load %arg1[%c0_28, %c0_29, %c0_30] : memref<1x32x256xf32, #tpu.memory_space<vmem>>, vector<1x32x256xf32>
    %84 = vector.shape_cast %83 : vector<1x32x256xf32> to vector<32x256xf32>
    %cst_31 = arith.constant dense<0.000000e+00> : vector<32xf32>
    %85 = vector.multi_reduction <add>, %84, %cst_31 [1] : vector<32x256xf32> to vector<32xf32>
    %86 = vector.shape_cast %85 : vector<32xf32> to vector<32x1xf32>
    %cst_32 = arith.constant 3.906250e-03 : f32
    %87 = vector.broadcast %cst_32 : f32 to vector<32x1xf32>
    %88 = arith.mulf %86, %87 : vector<32x1xf32>
    %cst_33 = arith.constant dense<0xFF800000> : vector<32xf32>
    %89 = vector.multi_reduction <maximumf>, %84, %cst_33 [1] : vector<32x256xf32> to vector<32xf32>
    %90 = vector.shape_cast %89 : vector<32xf32> to vector<32x1xf32>
    %91 = tpu.concatenate %88, %90 in 1 : vector<32x1xf32>, vector<32x1xf32> -> vector<32x2xf32>
    %c0_34 = arith.constant 0 : index
    %c0_35 = arith.constant 0 : index
    %92 = vector.load %arg2[%c0_34, %c0_35] : memref<2x32xf32, #tpu.memory_space<vmem>>, vector<2x32xf32>
    %cst_36 = arith.constant dense<0.000000e+00> : vector<2x2xf32>
    %93 = tpu.matmul %92, %91, %cst_36 {dimension_numbers = #tpu.dot_dimension_numbers<[1], [0], [0], [1], [0, 0, 1, 1], [], []>} : vector<2x32xf32>, vector<32x2xf32>, vector<2x2xf32> -> vector<2x2xf32>
    %cst_37 = arith.constant 0.000000e+00 : f32
    %94 = vector.broadcast %cst_37 : f32 to vector<2x2xf32>
    %95 = arith.maximumf %93, %94 : vector<2x2xf32>
    %c0_38 = arith.constant 0 : index
    %c0_39 = arith.constant 0 : index
    %96 = vector.load %arg3[%c0_38, %c0_39] : memref<32x2xf32, #tpu.memory_space<vmem>>, vector<32x2xf32>
    %cst_40 = arith.constant dense<0.000000e+00> : vector<32x2xf32>
    %97 = tpu.matmul %96, %95, %cst_40 {dimension_numbers = #tpu.dot_dimension_numbers<[1], [0], [0], [1], [0, 0, 1, 1], [], []>} : vector<32x2xf32>, vector<2x2xf32>, vector<32x2xf32> -> vector<32x2xf32>
    %98 = vector.extract_strided_slice %97 {offsets = [0, 0], sizes = [32, 1], strides = [1, 1]} : vector<32x2xf32> to vector<32x1xf32>
    %99 = vector.extract_strided_slice %97 {offsets = [0, 1], sizes = [32, 1], strides = [1, 1]} : vector<32x2xf32> to vector<32x1xf32>
    %100 = arith.addf %98, %99 : vector<32x1xf32>
    %101 = arith.negf %100 : vector<32x1xf32>
    %102 = math.exp %101 : vector<32x1xf32>
    %cst_41 = arith.constant 1.000000e+00 : f32
    %103 = vector.broadcast %cst_41 : f32 to vector<32x1xf32>
    %104 = arith.addf %103, %102 : vector<32x1xf32>
    %105 = arith.divf %103, %104 : vector<32x1xf32>
    %cst_42 = arith.constant 0.000000e+00 : f32
    %106 = vector.broadcast %cst_42 : f32 to vector<1x256xf32>
    %cst_43 = arith.constant 0xFF800000 : f32
    %107 = vector.broadcast %cst_43 : f32 to vector<1x256xf32>
    %108 = vector.broadcast %105 : vector<32x1xf32> to vector<32x256xf32>
    %109 = arith.mulf %108, %84 : vector<32x256xf32>
    %cst_44 = arith.constant dense<0.000000e+00> : vector<256xf32>
    %110 = vector.multi_reduction <add>, %109, %cst_44 [0] : vector<32x256xf32> to vector<256xf32>
    %111 = vector.shape_cast %110 : vector<256xf32> to vector<1x256xf32>
    %112 = arith.addf %106, %111 : vector<1x256xf32>
    %cst_45 = arith.constant dense<0xFF800000> : vector<256xf32>
    %113 = vector.multi_reduction <maximumf>, %109, %cst_45 [0] : vector<32x256xf32> to vector<256xf32>
    %114 = vector.shape_cast %113 : vector<256xf32> to vector<1x256xf32>
    %115 = arith.maximumf %107, %114 : vector<1x256xf32>
    %cst_46 = arith.constant 3.125000e-02 : f32
    %116 = vector.broadcast %cst_46 : f32 to vector<1x256xf32>
    %117 = arith.mulf %112, %116 : vector<1x256xf32>
    %118 = tpu.concatenate %117, %115 in 0 : vector<1x256xf32>, vector<1x256xf32> -> vector<2x256xf32>
    %119 = tpu.concatenate %81, %118, %81 in 1 : vector<2x3xf32>, vector<2x256xf32>, vector<2x3xf32> -> vector<2x262xf32>
    %120 = vector.extract_strided_slice %119 {offsets = [0, 0], sizes = [2, 256], strides = [1, 1]} : vector<2x262xf32> to vector<2x256xf32>
    %cst_47 = arith.constant 0.000000e+00 : f32
    %121 = vector.shape_cast %26 : vector<1x256xi1> to vector<1x256xi1>
    %122 = vector.broadcast %121 : vector<1x256xi1> to vector<2x256xi1>
    %123 = vector.broadcast %cst_47 : f32 to vector<2x256xf32>
    %124 = arith.select %122, %120, %123 : vector<2x256xi1>, vector<2x256xf32>
    %125 = tpu.concatenate %82, %124, %82 in 1 : vector<2x48xf32>, vector<2x256xf32>, vector<2x48xf32> -> vector<2x352xf32>
    %126 = vector.extract_strided_slice %119 {offsets = [0, 1], sizes = [2, 256], strides = [1, 1]} : vector<2x262xf32> to vector<2x256xf32>
    %cst_48 = arith.constant 0.000000e+00 : f32
    %127 = vector.shape_cast %35 : vector<1x256xi1> to vector<1x256xi1>
    %128 = vector.broadcast %127 : vector<1x256xi1> to vector<2x256xi1>
    %129 = vector.broadcast %cst_48 : f32 to vector<2x256xf32>
    %130 = arith.select %128, %126, %129 : vector<2x256xi1>, vector<2x256xf32>
    %131 = tpu.concatenate %82, %130, %82 in 1 : vector<2x48xf32>, vector<2x256xf32>, vector<2x48xf32> -> vector<2x352xf32>
    %132 = vector.extract_strided_slice %119 {offsets = [0, 2], sizes = [2, 256], strides = [1, 1]} : vector<2x262xf32> to vector<2x256xf32>
    %cst_49 = arith.constant 0.000000e+00 : f32
    %133 = vector.shape_cast %44 : vector<1x256xi1> to vector<1x256xi1>
    %134 = vector.broadcast %133 : vector<1x256xi1> to vector<2x256xi1>
    %135 = vector.broadcast %cst_49 : f32 to vector<2x256xf32>
    %136 = arith.select %134, %132, %135 : vector<2x256xi1>, vector<2x256xf32>
    %137 = tpu.concatenate %82, %136, %82 in 1 : vector<2x48xf32>, vector<2x256xf32>, vector<2x48xf32> -> vector<2x352xf32>
    %138 = vector.extract_strided_slice %119 {offsets = [0, 3], sizes = [2, 256], strides = [1, 1]} : vector<2x262xf32> to vector<2x256xf32>
    %cst_50 = arith.constant 0.000000e+00 : f32
    %139 = vector.shape_cast %53 : vector<1x256xi1> to vector<1x256xi1>
    %140 = vector.broadcast %139 : vector<1x256xi1> to vector<2x256xi1>
    %141 = vector.broadcast %cst_50 : f32 to vector<2x256xf32>
    %142 = arith.select %140, %138, %141 : vector<2x256xi1>, vector<2x256xf32>
    %143 = tpu.concatenate %82, %142, %82 in 1 : vector<2x48xf32>, vector<2x256xf32>, vector<2x48xf32> -> vector<2x352xf32>
    %144 = vector.extract_strided_slice %119 {offsets = [0, 4], sizes = [2, 256], strides = [1, 1]} : vector<2x262xf32> to vector<2x256xf32>
    %cst_51 = arith.constant 0.000000e+00 : f32
    %145 = vector.shape_cast %62 : vector<1x256xi1> to vector<1x256xi1>
    %146 = vector.broadcast %145 : vector<1x256xi1> to vector<2x256xi1>
    %147 = vector.broadcast %cst_51 : f32 to vector<2x256xf32>
    %148 = arith.select %146, %144, %147 : vector<2x256xi1>, vector<2x256xf32>
    %149 = tpu.concatenate %82, %148, %82 in 1 : vector<2x48xf32>, vector<2x256xf32>, vector<2x48xf32> -> vector<2x352xf32>
    %150 = vector.extract_strided_slice %119 {offsets = [0, 5], sizes = [2, 256], strides = [1, 1]} : vector<2x262xf32> to vector<2x256xf32>
    %cst_52 = arith.constant 0.000000e+00 : f32
    %151 = vector.shape_cast %71 : vector<1x256xi1> to vector<1x256xi1>
    %152 = vector.broadcast %151 : vector<1x256xi1> to vector<2x256xi1>
    %153 = vector.broadcast %cst_52 : f32 to vector<2x256xf32>
    %154 = arith.select %152, %150, %153 : vector<2x256xi1>, vector<2x256xf32>
    %155 = tpu.concatenate %82, %154, %82 in 1 : vector<2x48xf32>, vector<2x256xf32>, vector<2x48xf32> -> vector<2x352xf32>
    %156 = vector.extract_strided_slice %119 {offsets = [0, 6], sizes = [2, 256], strides = [1, 1]} : vector<2x262xf32> to vector<2x256xf32>
    %cst_53 = arith.constant 0.000000e+00 : f32
    %157 = vector.shape_cast %80 : vector<1x256xi1> to vector<1x256xi1>
    %158 = vector.broadcast %157 : vector<1x256xi1> to vector<2x256xi1>
    %159 = vector.broadcast %cst_53 : f32 to vector<2x256xf32>
    %160 = arith.select %158, %156, %159 : vector<2x256xi1>, vector<2x256xf32>
    %161 = tpu.concatenate %82, %160, %82 in 1 : vector<2x48xf32>, vector<2x256xf32>, vector<2x48xf32> -> vector<2x352xf32>
    %cst_54 = arith.constant 0.000000e+00 : f32
    %162 = vector.broadcast %cst_54 : f32 to vector<2x256xf32>
    %cst_55 = arith.constant 0.000000e+00 : f32
    %163 = vector.broadcast %cst_55 : f32 to vector<2x256xf32>
    %cst_56 = arith.constant 0.000000e+00 : f32
    %164 = vector.broadcast %cst_56 : f32 to vector<2x256xf32>
    %cst_57 = arith.constant 0.000000e+00 : f32
    %165 = vector.broadcast %cst_57 : f32 to vector<2x256xf32>
    %166 = vector.extract_strided_slice %0 {offsets = [0, 0], sizes = [2, 1], strides = [1, 1]} : vector<2x49xf32> to vector<2x1xf32>
    %167 = vector.extract_strided_slice %125 {offsets = [0, 0], sizes = [2, 256], strides = [1, 1]} : vector<2x352xf32> to vector<2x256xf32>
    %168 = vector.broadcast %166 : vector<2x1xf32> to vector<2x256xf32>
    %169 = arith.mulf %168, %167 : vector<2x256xf32>
    %170 = arith.addf %162, %169 : vector<2x256xf32>
    %171 = vector.extract_strided_slice %0 {offsets = [0, 1], sizes = [2, 1], strides = [1, 1]} : vector<2x49xf32> to vector<2x1xf32>
    %172 = vector.extract_strided_slice %131 {offsets = [0, 0], sizes = [2, 256], strides = [1, 1]} : vector<2x352xf32> to vector<2x256xf32>
    %173 = vector.broadcast %171 : vector<2x1xf32> to vector<2x256xf32>
    %174 = arith.mulf %173, %172 : vector<2x256xf32>
    %175 = arith.addf %163, %174 : vector<2x256xf32>
    %176 = vector.extract_strided_slice %0 {offsets = [0, 2], sizes = [2, 1], strides = [1, 1]} : vector<2x49xf32> to vector<2x1xf32>
    %177 = vector.extract_strided_slice %137 {offsets = [0, 0], sizes = [2, 256], strides = [1, 1]} : vector<2x352xf32> to vector<2x256xf32>
    %178 = vector.broadcast %176 : vector<2x1xf32> to vector<2x256xf32>
    %179 = arith.mulf %178, %177 : vector<2x256xf32>
    %180 = arith.addf %164, %179 : vector<2x256xf32>
    %181 = vector.extract_strided_slice %0 {offsets = [0, 3], sizes = [2, 1], strides = [1, 1]} : vector<2x49xf32> to vector<2x1xf32>
    %182 = vector.extract_strided_slice %143 {offsets = [0, 0], sizes = [2, 256], strides = [1, 1]} : vector<2x352xf32> to vector<2x256xf32>
    %183 = vector.broadcast %181 : vector<2x1xf32> to vector<2x256xf32>
    %184 = arith.mulf %183, %182 : vector<2x256xf32>
    %185 = arith.addf %165, %184 : vector<2x256xf32>
    %186 = vector.extract_strided_slice %0 {offsets = [0, 4], sizes = [2, 1], strides = [1, 1]} : vector<2x49xf32> to vector<2x1xf32>
    %187 = vector.extract_strided_slice %149 {offsets = [0, 0], sizes = [2, 256], strides = [1, 1]} : vector<2x352xf32> to vector<2x256xf32>
    %188 = vector.broadcast %186 : vector<2x1xf32> to vector<2x256xf32>
    %189 = arith.mulf %188, %187 : vector<2x256xf32>
    %190 = arith.addf %170, %189 : vector<2x256xf32>
    %191 = vector.extract_strided_slice %0 {offsets = [0, 5], sizes = [2, 1], strides = [1, 1]} : vector<2x49xf32> to vector<2x1xf32>
    %192 = vector.extract_strided_slice %155 {offsets = [0, 0], sizes = [2, 256], strides = [1, 1]} : vector<2x352xf32> to vector<2x256xf32>
    %193 = vector.broadcast %191 : vector<2x1xf32> to vector<2x256xf32>
    %194 = arith.mulf %193, %192 : vector<2x256xf32>
    %195 = arith.addf %175, %194 : vector<2x256xf32>
    %196 = vector.extract_strided_slice %0 {offsets = [0, 6], sizes = [2, 1], strides = [1, 1]} : vector<2x49xf32> to vector<2x1xf32>
    %197 = vector.extract_strided_slice %161 {offsets = [0, 0], sizes = [2, 256], strides = [1, 1]} : vector<2x352xf32> to vector<2x256xf32>
    %198 = vector.broadcast %196 : vector<2x1xf32> to vector<2x256xf32>
    %199 = arith.mulf %198, %197 : vector<2x256xf32>
    %200 = arith.addf %180, %199 : vector<2x256xf32>
    %201 = vector.extract_strided_slice %0 {offsets = [0, 7], sizes = [2, 1], strides = [1, 1]} : vector<2x49xf32> to vector<2x1xf32>
    %202 = vector.extract_strided_slice %125 {offsets = [0, 16], sizes = [2, 256], strides = [1, 1]} : vector<2x352xf32> to vector<2x256xf32>
    %203 = vector.broadcast %201 : vector<2x1xf32> to vector<2x256xf32>
    %204 = arith.mulf %203, %202 : vector<2x256xf32>
    %205 = arith.addf %185, %204 : vector<2x256xf32>
    %206 = vector.extract_strided_slice %0 {offsets = [0, 8], sizes = [2, 1], strides = [1, 1]} : vector<2x49xf32> to vector<2x1xf32>
    %207 = vector.extract_strided_slice %131 {offsets = [0, 16], sizes = [2, 256], strides = [1, 1]} : vector<2x352xf32> to vector<2x256xf32>
    %208 = vector.broadcast %206 : vector<2x1xf32> to vector<2x256xf32>
    %209 = arith.mulf %208, %207 : vector<2x256xf32>
    %210 = arith.addf %190, %209 : vector<2x256xf32>
    %211 = vector.extract_strided_slice %0 {offsets = [0, 9], sizes = [2, 1], strides = [1, 1]} : vector<2x49xf32> to vector<2x1xf32>
    %212 = vector.extract_strided_slice %137 {offsets = [0, 16], sizes = [2, 256], strides = [1, 1]} : vector<2x352xf32> to vector<2x256xf32>
    %213 = vector.broadcast %211 : vector<2x1xf32> to vector<2x256xf32>
    %214 = arith.mulf %213, %212 : vector<2x256xf32>
    %215 = arith.addf %195, %214 : vector<2x256xf32>
    %216 = vector.extract_strided_slice %0 {offsets = [0, 10], sizes = [2, 1], strides = [1, 1]} : vector<2x49xf32> to vector<2x1xf32>
    %217 = vector.extract_strided_slice %143 {offsets = [0, 16], sizes = [2, 256], strides = [1, 1]} : vector<2x352xf32> to vector<2x256xf32>
    %218 = vector.broadcast %216 : vector<2x1xf32> to vector<2x256xf32>
    %219 = arith.mulf %218, %217 : vector<2x256xf32>
    %220 = arith.addf %200, %219 : vector<2x256xf32>
    %221 = vector.extract_strided_slice %0 {offsets = [0, 11], sizes = [2, 1], strides = [1, 1]} : vector<2x49xf32> to vector<2x1xf32>
    %222 = vector.extract_strided_slice %149 {offsets = [0, 16], sizes = [2, 256], strides = [1, 1]} : vector<2x352xf32> to vector<2x256xf32>
    %223 = vector.broadcast %221 : vector<2x1xf32> to vector<2x256xf32>
    %224 = arith.mulf %223, %222 : vector<2x256xf32>
    %225 = arith.addf %205, %224 : vector<2x256xf32>
    %226 = vector.extract_strided_slice %0 {offsets = [0, 12], sizes = [2, 1], strides = [1, 1]} : vector<2x49xf32> to vector<2x1xf32>
    %227 = vector.extract_strided_slice %155 {offsets = [0, 16], sizes = [2, 256], strides = [1, 1]} : vector<2x352xf32> to vector<2x256xf32>
    %228 = vector.broadcast %226 : vector<2x1xf32> to vector<2x256xf32>
    %229 = arith.mulf %228, %227 : vector<2x256xf32>
    %230 = arith.addf %210, %229 : vector<2x256xf32>
    %231 = vector.extract_strided_slice %0 {offsets = [0, 13], sizes = [2, 1], strides = [1, 1]} : vector<2x49xf32> to vector<2x1xf32>
    %232 = vector.extract_strided_slice %161 {offsets = [0, 16], sizes = [2, 256], strides = [1, 1]} : vector<2x352xf32> to vector<2x256xf32>
    %233 = vector.broadcast %231 : vector<2x1xf32> to vector<2x256xf32>
    %234 = arith.mulf %233, %232 : vector<2x256xf32>
    %235 = arith.addf %215, %234 : vector<2x256xf32>
    %236 = vector.extract_strided_slice %0 {offsets = [0, 14], sizes = [2, 1], strides = [1, 1]} : vector<2x49xf32> to vector<2x1xf32>
    %237 = vector.extract_strided_slice %125 {offsets = [0, 32], sizes = [2, 256], strides = [1, 1]} : vector<2x352xf32> to vector<2x256xf32>
    %238 = vector.broadcast %236 : vector<2x1xf32> to vector<2x256xf32>
    %239 = arith.mulf %238, %237 : vector<2x256xf32>
    %240 = arith.addf %220, %239 : vector<2x256xf32>
    %241 = vector.extract_strided_slice %0 {offsets = [0, 15], sizes = [2, 1], strides = [1, 1]} : vector<2x49xf32> to vector<2x1xf32>
    %242 = vector.extract_strided_slice %131 {offsets = [0, 32], sizes = [2, 256], strides = [1, 1]} : vector<2x352xf32> to vector<2x256xf32>
    %243 = vector.broadcast %241 : vector<2x1xf32> to vector<2x256xf32>
    %244 = arith.mulf %243, %242 : vector<2x256xf32>
    %245 = arith.addf %225, %244 : vector<2x256xf32>
    %246 = vector.extract_strided_slice %0 {offsets = [0, 16], sizes = [2, 1], strides = [1, 1]} : vector<2x49xf32> to vector<2x1xf32>
    %247 = vector.extract_strided_slice %137 {offsets = [0, 32], sizes = [2, 256], strides = [1, 1]} : vector<2x352xf32> to vector<2x256xf32>
    %248 = vector.broadcast %246 : vector<2x1xf32> to vector<2x256xf32>
    %249 = arith.mulf %248, %247 : vector<2x256xf32>
    %250 = arith.addf %230, %249 : vector<2x256xf32>
    %251 = vector.extract_strided_slice %0 {offsets = [0, 17], sizes = [2, 1], strides = [1, 1]} : vector<2x49xf32> to vector<2x1xf32>
    %252 = vector.extract_strided_slice %143 {offsets = [0, 32], sizes = [2, 256], strides = [1, 1]} : vector<2x352xf32> to vector<2x256xf32>
    %253 = vector.broadcast %251 : vector<2x1xf32> to vector<2x256xf32>
    %254 = arith.mulf %253, %252 : vector<2x256xf32>
    %255 = arith.addf %235, %254 : vector<2x256xf32>
    %256 = vector.extract_strided_slice %0 {offsets = [0, 18], sizes = [2, 1], strides = [1, 1]} : vector<2x49xf32> to vector<2x1xf32>
    %257 = vector.extract_strided_slice %149 {offsets = [0, 32], sizes = [2, 256], strides = [1, 1]} : vector<2x352xf32> to vector<2x256xf32>
    %258 = vector.broadcast %256 : vector<2x1xf32> to vector<2x256xf32>
    %259 = arith.mulf %258, %257 : vector<2x256xf32>
    %260 = arith.addf %240, %259 : vector<2x256xf32>
    %261 = vector.extract_strided_slice %0 {offsets = [0, 19], sizes = [2, 1], strides = [1, 1]} : vector<2x49xf32> to vector<2x1xf32>
    %262 = vector.extract_strided_slice %155 {offsets = [0, 32], sizes = [2, 256], strides = [1, 1]} : vector<2x352xf32> to vector<2x256xf32>
    %263 = vector.broadcast %261 : vector<2x1xf32> to vector<2x256xf32>
    %264 = arith.mulf %263, %262 : vector<2x256xf32>
    %265 = arith.addf %245, %264 : vector<2x256xf32>
    %266 = vector.extract_strided_slice %0 {offsets = [0, 20], sizes = [2, 1], strides = [1, 1]} : vector<2x49xf32> to vector<2x1xf32>
    %267 = vector.extract_strided_slice %161 {offsets = [0, 32], sizes = [2, 256], strides = [1, 1]} : vector<2x352xf32> to vector<2x256xf32>
    %268 = vector.broadcast %266 : vector<2x1xf32> to vector<2x256xf32>
    %269 = arith.mulf %268, %267 : vector<2x256xf32>
    %270 = arith.addf %250, %269 : vector<2x256xf32>
    %271 = vector.extract_strided_slice %0 {offsets = [0, 21], sizes = [2, 1], strides = [1, 1]} : vector<2x49xf32> to vector<2x1xf32>
    %272 = vector.extract_strided_slice %125 {offsets = [0, 48], sizes = [2, 256], strides = [1, 1]} : vector<2x352xf32> to vector<2x256xf32>
    %273 = vector.broadcast %271 : vector<2x1xf32> to vector<2x256xf32>
    %274 = arith.mulf %273, %272 : vector<2x256xf32>
    %275 = arith.addf %255, %274 : vector<2x256xf32>
    %276 = vector.extract_strided_slice %0 {offsets = [0, 22], sizes = [2, 1], strides = [1, 1]} : vector<2x49xf32> to vector<2x1xf32>
    %277 = vector.extract_strided_slice %131 {offsets = [0, 48], sizes = [2, 256], strides = [1, 1]} : vector<2x352xf32> to vector<2x256xf32>
    %278 = vector.broadcast %276 : vector<2x1xf32> to vector<2x256xf32>
    %279 = arith.mulf %278, %277 : vector<2x256xf32>
    %280 = arith.addf %260, %279 : vector<2x256xf32>
    %281 = vector.extract_strided_slice %0 {offsets = [0, 23], sizes = [2, 1], strides = [1, 1]} : vector<2x49xf32> to vector<2x1xf32>
    %282 = vector.extract_strided_slice %137 {offsets = [0, 48], sizes = [2, 256], strides = [1, 1]} : vector<2x352xf32> to vector<2x256xf32>
    %283 = vector.broadcast %281 : vector<2x1xf32> to vector<2x256xf32>
    %284 = arith.mulf %283, %282 : vector<2x256xf32>
    %285 = arith.addf %265, %284 : vector<2x256xf32>
    %286 = vector.extract_strided_slice %0 {offsets = [0, 24], sizes = [2, 1], strides = [1, 1]} : vector<2x49xf32> to vector<2x1xf32>
    %287 = vector.extract_strided_slice %143 {offsets = [0, 48], sizes = [2, 256], strides = [1, 1]} : vector<2x352xf32> to vector<2x256xf32>
    %288 = vector.broadcast %286 : vector<2x1xf32> to vector<2x256xf32>
    %289 = arith.mulf %288, %287 : vector<2x256xf32>
    %290 = arith.addf %270, %289 : vector<2x256xf32>
    %291 = vector.extract_strided_slice %0 {offsets = [0, 25], sizes = [2, 1], strides = [1, 1]} : vector<2x49xf32> to vector<2x1xf32>
    %292 = vector.extract_strided_slice %149 {offsets = [0, 48], sizes = [2, 256], strides = [1, 1]} : vector<2x352xf32> to vector<2x256xf32>
    %293 = vector.broadcast %291 : vector<2x1xf32> to vector<2x256xf32>
    %294 = arith.mulf %293, %292 : vector<2x256xf32>
    %295 = arith.addf %275, %294 : vector<2x256xf32>
    %296 = vector.extract_strided_slice %0 {offsets = [0, 26], sizes = [2, 1], strides = [1, 1]} : vector<2x49xf32> to vector<2x1xf32>
    %297 = vector.extract_strided_slice %155 {offsets = [0, 48], sizes = [2, 256], strides = [1, 1]} : vector<2x352xf32> to vector<2x256xf32>
    %298 = vector.broadcast %296 : vector<2x1xf32> to vector<2x256xf32>
    %299 = arith.mulf %298, %297 : vector<2x256xf32>
    %300 = arith.addf %280, %299 : vector<2x256xf32>
    %301 = vector.extract_strided_slice %0 {offsets = [0, 27], sizes = [2, 1], strides = [1, 1]} : vector<2x49xf32> to vector<2x1xf32>
    %302 = vector.extract_strided_slice %161 {offsets = [0, 48], sizes = [2, 256], strides = [1, 1]} : vector<2x352xf32> to vector<2x256xf32>
    %303 = vector.broadcast %301 : vector<2x1xf32> to vector<2x256xf32>
    %304 = arith.mulf %303, %302 : vector<2x256xf32>
    %305 = arith.addf %285, %304 : vector<2x256xf32>
    %306 = vector.extract_strided_slice %0 {offsets = [0, 28], sizes = [2, 1], strides = [1, 1]} : vector<2x49xf32> to vector<2x1xf32>
    %307 = vector.extract_strided_slice %125 {offsets = [0, 64], sizes = [2, 256], strides = [1, 1]} : vector<2x352xf32> to vector<2x256xf32>
    %308 = vector.broadcast %306 : vector<2x1xf32> to vector<2x256xf32>
    %309 = arith.mulf %308, %307 : vector<2x256xf32>
    %310 = arith.addf %290, %309 : vector<2x256xf32>
    %311 = vector.extract_strided_slice %0 {offsets = [0, 29], sizes = [2, 1], strides = [1, 1]} : vector<2x49xf32> to vector<2x1xf32>
    %312 = vector.extract_strided_slice %131 {offsets = [0, 64], sizes = [2, 256], strides = [1, 1]} : vector<2x352xf32> to vector<2x256xf32>
    %313 = vector.broadcast %311 : vector<2x1xf32> to vector<2x256xf32>
    %314 = arith.mulf %313, %312 : vector<2x256xf32>
    %315 = arith.addf %295, %314 : vector<2x256xf32>
    %316 = vector.extract_strided_slice %0 {offsets = [0, 30], sizes = [2, 1], strides = [1, 1]} : vector<2x49xf32> to vector<2x1xf32>
    %317 = vector.extract_strided_slice %137 {offsets = [0, 64], sizes = [2, 256], strides = [1, 1]} : vector<2x352xf32> to vector<2x256xf32>
    %318 = vector.broadcast %316 : vector<2x1xf32> to vector<2x256xf32>
    %319 = arith.mulf %318, %317 : vector<2x256xf32>
    %320 = arith.addf %300, %319 : vector<2x256xf32>
    %321 = vector.extract_strided_slice %0 {offsets = [0, 31], sizes = [2, 1], strides = [1, 1]} : vector<2x49xf32> to vector<2x1xf32>
    %322 = vector.extract_strided_slice %143 {offsets = [0, 64], sizes = [2, 256], strides = [1, 1]} : vector<2x352xf32> to vector<2x256xf32>
    %323 = vector.broadcast %321 : vector<2x1xf32> to vector<2x256xf32>
    %324 = arith.mulf %323, %322 : vector<2x256xf32>
    %325 = arith.addf %305, %324 : vector<2x256xf32>
    %326 = vector.extract_strided_slice %0 {offsets = [0, 32], sizes = [2, 1], strides = [1, 1]} : vector<2x49xf32> to vector<2x1xf32>
    %327 = vector.extract_strided_slice %149 {offsets = [0, 64], sizes = [2, 256], strides = [1, 1]} : vector<2x352xf32> to vector<2x256xf32>
    %328 = vector.broadcast %326 : vector<2x1xf32> to vector<2x256xf32>
    %329 = arith.mulf %328, %327 : vector<2x256xf32>
    %330 = arith.addf %310, %329 : vector<2x256xf32>
    %331 = vector.extract_strided_slice %0 {offsets = [0, 33], sizes = [2, 1], strides = [1, 1]} : vector<2x49xf32> to vector<2x1xf32>
    %332 = vector.extract_strided_slice %155 {offsets = [0, 64], sizes = [2, 256], strides = [1, 1]} : vector<2x352xf32> to vector<2x256xf32>
    %333 = vector.broadcast %331 : vector<2x1xf32> to vector<2x256xf32>
    %334 = arith.mulf %333, %332 : vector<2x256xf32>
    %335 = arith.addf %315, %334 : vector<2x256xf32>
    %336 = vector.extract_strided_slice %0 {offsets = [0, 34], sizes = [2, 1], strides = [1, 1]} : vector<2x49xf32> to vector<2x1xf32>
    %337 = vector.extract_strided_slice %161 {offsets = [0, 64], sizes = [2, 256], strides = [1, 1]} : vector<2x352xf32> to vector<2x256xf32>
    %338 = vector.broadcast %336 : vector<2x1xf32> to vector<2x256xf32>
    %339 = arith.mulf %338, %337 : vector<2x256xf32>
    %340 = arith.addf %320, %339 : vector<2x256xf32>
    %341 = vector.extract_strided_slice %0 {offsets = [0, 35], sizes = [2, 1], strides = [1, 1]} : vector<2x49xf32> to vector<2x1xf32>
    %342 = vector.extract_strided_slice %125 {offsets = [0, 80], sizes = [2, 256], strides = [1, 1]} : vector<2x352xf32> to vector<2x256xf32>
    %343 = vector.broadcast %341 : vector<2x1xf32> to vector<2x256xf32>
    %344 = arith.mulf %343, %342 : vector<2x256xf32>
    %345 = arith.addf %325, %344 : vector<2x256xf32>
    %346 = vector.extract_strided_slice %0 {offsets = [0, 36], sizes = [2, 1], strides = [1, 1]} : vector<2x49xf32> to vector<2x1xf32>
    %347 = vector.extract_strided_slice %131 {offsets = [0, 80], sizes = [2, 256], strides = [1, 1]} : vector<2x352xf32> to vector<2x256xf32>
    %348 = vector.broadcast %346 : vector<2x1xf32> to vector<2x256xf32>
    %349 = arith.mulf %348, %347 : vector<2x256xf32>
    %350 = arith.addf %330, %349 : vector<2x256xf32>
    %351 = vector.extract_strided_slice %0 {offsets = [0, 37], sizes = [2, 1], strides = [1, 1]} : vector<2x49xf32> to vector<2x1xf32>
    %352 = vector.extract_strided_slice %137 {offsets = [0, 80], sizes = [2, 256], strides = [1, 1]} : vector<2x352xf32> to vector<2x256xf32>
    %353 = vector.broadcast %351 : vector<2x1xf32> to vector<2x256xf32>
    %354 = arith.mulf %353, %352 : vector<2x256xf32>
    %355 = arith.addf %335, %354 : vector<2x256xf32>
    %356 = vector.extract_strided_slice %0 {offsets = [0, 38], sizes = [2, 1], strides = [1, 1]} : vector<2x49xf32> to vector<2x1xf32>
    %357 = vector.extract_strided_slice %143 {offsets = [0, 80], sizes = [2, 256], strides = [1, 1]} : vector<2x352xf32> to vector<2x256xf32>
    %358 = vector.broadcast %356 : vector<2x1xf32> to vector<2x256xf32>
    %359 = arith.mulf %358, %357 : vector<2x256xf32>
    %360 = arith.addf %340, %359 : vector<2x256xf32>
    %361 = vector.extract_strided_slice %0 {offsets = [0, 39], sizes = [2, 1], strides = [1, 1]} : vector<2x49xf32> to vector<2x1xf32>
    %362 = vector.extract_strided_slice %149 {offsets = [0, 80], sizes = [2, 256], strides = [1, 1]} : vector<2x352xf32> to vector<2x256xf32>
    %363 = vector.broadcast %361 : vector<2x1xf32> to vector<2x256xf32>
    %364 = arith.mulf %363, %362 : vector<2x256xf32>
    %365 = arith.addf %345, %364 : vector<2x256xf32>
    %366 = vector.extract_strided_slice %0 {offsets = [0, 40], sizes = [2, 1], strides = [1, 1]} : vector<2x49xf32> to vector<2x1xf32>
    %367 = vector.extract_strided_slice %155 {offsets = [0, 80], sizes = [2, 256], strides = [1, 1]} : vector<2x352xf32> to vector<2x256xf32>
    %368 = vector.broadcast %366 : vector<2x1xf32> to vector<2x256xf32>
    %369 = arith.mulf %368, %367 : vector<2x256xf32>
    %370 = arith.addf %350, %369 : vector<2x256xf32>
    %371 = vector.extract_strided_slice %0 {offsets = [0, 41], sizes = [2, 1], strides = [1, 1]} : vector<2x49xf32> to vector<2x1xf32>
    %372 = vector.extract_strided_slice %161 {offsets = [0, 80], sizes = [2, 256], strides = [1, 1]} : vector<2x352xf32> to vector<2x256xf32>
    %373 = vector.broadcast %371 : vector<2x1xf32> to vector<2x256xf32>
    %374 = arith.mulf %373, %372 : vector<2x256xf32>
    %375 = arith.addf %355, %374 : vector<2x256xf32>
    %376 = vector.extract_strided_slice %0 {offsets = [0, 42], sizes = [2, 1], strides = [1, 1]} : vector<2x49xf32> to vector<2x1xf32>
    %377 = vector.extract_strided_slice %125 {offsets = [0, 96], sizes = [2, 256], strides = [1, 1]} : vector<2x352xf32> to vector<2x256xf32>
    %378 = vector.broadcast %376 : vector<2x1xf32> to vector<2x256xf32>
    %379 = arith.mulf %378, %377 : vector<2x256xf32>
    %380 = arith.addf %360, %379 : vector<2x256xf32>
    %381 = vector.extract_strided_slice %0 {offsets = [0, 43], sizes = [2, 1], strides = [1, 1]} : vector<2x49xf32> to vector<2x1xf32>
    %382 = vector.extract_strided_slice %131 {offsets = [0, 96], sizes = [2, 256], strides = [1, 1]} : vector<2x352xf32> to vector<2x256xf32>
    %383 = vector.broadcast %381 : vector<2x1xf32> to vector<2x256xf32>
    %384 = arith.mulf %383, %382 : vector<2x256xf32>
    %385 = arith.addf %365, %384 : vector<2x256xf32>
    %386 = vector.extract_strided_slice %0 {offsets = [0, 44], sizes = [2, 1], strides = [1, 1]} : vector<2x49xf32> to vector<2x1xf32>
    %387 = vector.extract_strided_slice %137 {offsets = [0, 96], sizes = [2, 256], strides = [1, 1]} : vector<2x352xf32> to vector<2x256xf32>
    %388 = vector.broadcast %386 : vector<2x1xf32> to vector<2x256xf32>
    %389 = arith.mulf %388, %387 : vector<2x256xf32>
    %390 = arith.addf %370, %389 : vector<2x256xf32>
    %391 = vector.extract_strided_slice %0 {offsets = [0, 45], sizes = [2, 1], strides = [1, 1]} : vector<2x49xf32> to vector<2x1xf32>
    %392 = vector.extract_strided_slice %143 {offsets = [0, 96], sizes = [2, 256], strides = [1, 1]} : vector<2x352xf32> to vector<2x256xf32>
    %393 = vector.broadcast %391 : vector<2x1xf32> to vector<2x256xf32>
    %394 = arith.mulf %393, %392 : vector<2x256xf32>
    %395 = arith.addf %375, %394 : vector<2x256xf32>
    %396 = vector.extract_strided_slice %0 {offsets = [0, 46], sizes = [2, 1], strides = [1, 1]} : vector<2x49xf32> to vector<2x1xf32>
    %397 = vector.extract_strided_slice %149 {offsets = [0, 96], sizes = [2, 256], strides = [1, 1]} : vector<2x352xf32> to vector<2x256xf32>
    %398 = vector.broadcast %396 : vector<2x1xf32> to vector<2x256xf32>
    %399 = arith.mulf %398, %397 : vector<2x256xf32>
    %400 = arith.addf %380, %399 : vector<2x256xf32>
    %401 = vector.extract_strided_slice %0 {offsets = [0, 47], sizes = [2, 1], strides = [1, 1]} : vector<2x49xf32> to vector<2x1xf32>
    %402 = vector.extract_strided_slice %155 {offsets = [0, 96], sizes = [2, 256], strides = [1, 1]} : vector<2x352xf32> to vector<2x256xf32>
    %403 = vector.broadcast %401 : vector<2x1xf32> to vector<2x256xf32>
    %404 = arith.mulf %403, %402 : vector<2x256xf32>
    %405 = arith.addf %385, %404 : vector<2x256xf32>
    %406 = vector.extract_strided_slice %0 {offsets = [0, 48], sizes = [2, 1], strides = [1, 1]} : vector<2x49xf32> to vector<2x1xf32>
    %407 = vector.extract_strided_slice %161 {offsets = [0, 96], sizes = [2, 256], strides = [1, 1]} : vector<2x352xf32> to vector<2x256xf32>
    %408 = vector.broadcast %406 : vector<2x1xf32> to vector<2x256xf32>
    %409 = arith.mulf %408, %407 : vector<2x256xf32>
    %410 = arith.addf %390, %409 : vector<2x256xf32>
    %411 = arith.addf %410, %395 : vector<2x256xf32>
    %412 = arith.addf %411, %400 : vector<2x256xf32>
    %413 = arith.addf %412, %405 : vector<2x256xf32>
    %414 = vector.extract_strided_slice %413 {offsets = [0, 0], sizes = [1, 256], strides = [1, 1]} : vector<2x256xf32> to vector<1x256xf32>
    %415 = vector.extract_strided_slice %413 {offsets = [1, 0], sizes = [1, 256], strides = [1, 1]} : vector<2x256xf32> to vector<1x256xf32>
    %416 = arith.addf %414, %415 : vector<1x256xf32>
    %417 = arith.negf %416 : vector<1x256xf32>
    %418 = math.exp %417 : vector<1x256xf32>
    %cst_58 = arith.constant 1.000000e+00 : f32
    %419 = vector.broadcast %cst_58 : f32 to vector<1x256xf32>
    %420 = arith.addf %419, %418 : vector<1x256xf32>
    %421 = arith.divf %419, %420 : vector<1x256xf32>
    %422 = vector.broadcast %105 : vector<32x1xf32> to vector<32x256xf32>
    %423 = arith.mulf %84, %422 : vector<32x256xf32>
    %424 = vector.broadcast %421 : vector<1x256xf32> to vector<32x256xf32>
    %425 = arith.mulf %423, %424 : vector<32x256xf32>
    %c0_59 = arith.constant 0 : index
    %c0_60 = arith.constant 0 : index
    %c0_61 = arith.constant 0 : index
    %426 = vector.load %arg5[%c0_59, %c0_60, %c0_61] : memref<1x32x256xf32, #tpu.memory_space<vmem>>, vector<1x32x256xf32>
    %427 = vector.shape_cast %426 : vector<1x32x256xf32> to vector<32x256xf32>
    %428 = vector.shape_cast %425 : vector<32x256xf32> to vector<1x32x256xf32>
    tpu.vector_store %arg5[%c0_59, %c0_60, %c0_61], %428 {strides = array<i32>} : memref<1x32x256xf32, #tpu.memory_space<vmem>>, vector<1x32x256xf32>,
    return
  }
  func.func @transform_0(%arg0: i32) -> (i32, i32, i32) {
    %c0_i32 = arith.constant 0 : i32
    %c0_i32_0 = arith.constant 0 : i32
    %c0_i32_1 = arith.constant 0 : i32
    return %arg0, %c0_i32, %c0_i32_0 : i32, i32, i32
  }
  func.func @transform_1(%arg0: i32) -> (i32, i32) {
    %c0_i32 = arith.constant 0 : i32
    %c0_i32_0 = arith.constant 0 : i32
    %c0_i32_1 = arith.constant 0 : i32
    return %c0_i32, %c0_i32_0 : i32, i32
  }
  func.func @transform_2(%arg0: i32) -> (i32, i32) {
    %c0_i32 = arith.constant 0 : i32
    %c0_i32_0 = arith.constant 0 : i32
    %c0_i32_1 = arith.constant 0 : i32
    return %c0_i32, %c0_i32_0 : i32, i32
  }
  func.func @transform_3(%arg0: i32) -> (i32, i32) {
    %c0_i32 = arith.constant 0 : i32
    %c0_i32_0 = arith.constant 0 : i32
    %c0_i32_1 = arith.constant 0 : i32
    return %c0_i32, %c0_i32_0 : i32, i32
  }
  func.func @transform_4(%arg0: i32) -> (i32, i32, i32) {
    %c0_i32 = arith.constant 0 : i32
    %c0_i32_0 = arith.constant 0 : i32
    %c0_i32_1 = arith.constant 0 : i32
    return %arg0, %c0_i32, %c0_i32_0 : i32, i32, i32
  }
}

</mosaic_0001>

<llo_original>
// kernel: tpu_custom_call.1
$region0: #{tpu_custom_call.1}
  #allocation0 [shape = 'u32[]', space=smem, size = 0x4, offset = 0x4, fixed_abs, tag = 'smem constant byte address 0x4 - core index']
  #allocation1 [shape = 'u32[144,128]{1,0:T(1,128)}', space=vmem, size = 0x12000, scoped, tag = 'internal scratch']
  %s0 = inlined_call_operand.hbm [shape: f32[2,32,256], index: 0, kind: input, shape index: {}]
  %s1 = inlined_call_operand.vmem [shape: f32[2,32], index: 1, kind: input, shape index: {}]
  %s2 = inlined_call_operand.vmem [shape: f32[32,2], index: 2, kind: input, shape index: {}]
  %s3 = inlined_call_operand.vmem [shape: f32[2,49], index: 3, kind: input, shape index: {}]
  %s4 = inlined_call_operand.hbm [shape: f32[2,32,256], index: 4, kind: output, shape index: {}]
  %s5 = sld [smem:[#allocation0]]
  $region53: #{tpu_custom_call.1} parent=0
    _
  %s7 = ssub.s32 1, %s5
  %s8 = scalar_select 0, %s7, %s5
  $region1: #{tpu_custom_call.1} parent=0
    #allocation2 [shape = 'u8[65536]{0}', space=vmem, size = 0x10000, scoped, tag = 'input window, operand 0']
    #allocation3 [shape = 's32[2]{0}', space=sflag, size = 0x8, scoped, tag = 'scoped memory for tpu_custom_call.1']
    #allocation4 [shape = 's32[2]{0}', space=sflag, size = 0x8, scoped, tag = 'scoped memory for tpu_custom_call.1']
    #allocation5 [shape = 'u8[65536]{0}', space=vmem, size = 0x10000, scoped, tag = 'output window, operand 0']
    %9 = vsyncpa [#allocation3], 0
    %s10 = scalar_lea.sflag [#allocation3], 1
    %11 = vsyncpa %s10, 0
    %12 = vsyncpa [#allocation4], 0
    %s13 = scalar_lea.sflag [#allocation4], 1
    %14 = vsyncpa %s13, 0
    loop: start=0, step=1, limit=4
    $region2: #{tpu_custom_call.1} parent=1 // loop_pre_header
      _
    $region3: #{tpu_custom_call.1} parent=1 // loop_header
      %s16 = sphi 0, %s20
      %p17 = scmp.ge.s32.totalorder %s16, 4
      %s26 = sphi 0, %s28
      %s29 = sphi 0, %s26
      %s30 = sphi 0, %s29
      %s46 = sphi 0, %s30
      %s50 = sphi 0, %s50
      %s52 = sphi 0, %s50
      %s53 = sphi 0, %s52
      %s67 = sphi 0, %s53
      %s71 = sphi 0, %s71
      %s73 = sphi 0, %s71
      %s74 = sphi 0, %s73
      %s88 = sphi 0, %s74
      %s92 = sphi 0, %s92
      %s94 = sphi 0, %s92
      %s95 = sphi 0, %s94
      %s109 = sphi 0, %s95
      %s115 = sphi 0, %s117
      %s118 = sphi 0, %s115
      %s119 = sphi 0, %s118
      %s135 = sphi 0, %s119
    $region4: #{tpu_custom_call.1} parent=1 // loop_header_branch
      %19 = sbr.rel (%p17) target = $region8
    $region5: #{tpu_custom_call.1} parent=1 // loop_body
      %s21 = ssub.s32 %s16, 1
      %s22 = ssub.s32 %s16, 2
      %s23 = sadd.s32 %s16, 1
      %s24 = ssub.s32 %s16, %s23
      %p25 = scmp.eq.s32.totalorder %s24, 0
      %s27 = sadd.s32 %s26, 1
      %s28 = scalar_select %p25, %s26, %s27
      %p31 = pneg %p25
      %p32 = scmp.eq.s32.totalorder %s16, 1
      %p33 = por %p31, %p32
      %p34 = scmp.ne.s32.totalorder %s26, %s29
      %p35 = scmp.eq.s32.totalorder %s16, 0
      %p36 = por %p34, %p35
      %p37 = scmp.ne.s32.totalorder %s26, %s29
      %p38 = scmp.eq.s32.totalorder %s21, 1
      %p39 = por %p37, %p38
      %p40 = scmp.ne.s32.totalorder %s29, %s30
      %p41 = scmp.eq.s32.totalorder %s21, 0
      %p42 = por %p40, %p41
      %p43 = scmp.ne.s32.totalorder %s29, %s30
      %p44 = scmp.eq.s32.totalorder %s22, 1
      %p45 = por %p43, %p44
      %p47 = scmp.ne.s32.totalorder %s30, %s46
      %p48 = scmp.eq.s32.totalorder %s22, 0
      %p49 = por %p47, %p48
      %s51 = sadd.s32 %s50, 1
      %p54 = scmp.eq.s32.totalorder %s16, 1
      %p55 = scmp.ne.s32.totalorder %s50, %s52
      %p56 = scmp.eq.s32.totalorder %s16, 0
      %p57 = por %p55, %p56
      %p58 = scmp.ne.s32.totalorder %s50, %s52
      %p59 = scmp.eq.s32.totalorder %s21, 1
      %p60 = por %p58, %p59
      %p61 = scmp.ne.s32.totalorder %s52, %s53
      %p62 = scmp.eq.s32.totalorder %s21, 0
      %p63 = por %p61, %p62
      %p64 = scmp.ne.s32.totalorder %s52, %s53
      %p65 = scmp.eq.s32.totalorder %s22, 1
      %p66 = por %p64, %p65
      %p68 = scmp.ne.s32.totalorder %s53, %s67
      %p69 = scmp.eq.s32.totalorder %s22, 0
      %p70 = por %p68, %p69
      %s72 = sadd.s32 %s71, 1
      %p75 = scmp.eq.s32.totalorder %s16, 1
      %p76 = scmp.ne.s32.totalorder %s71, %s73
      %p77 = scmp.eq.s32.totalorder %s16, 0
      %p78 = por %p76, %p77
      %p79 = scmp.ne.s32.totalorder %s71, %s73
      %p80 = scmp.eq.s32.totalorder %s21, 1
      %p81 = por %p79, %p80
      %p82 = scmp.ne.s32.totalorder %s73, %s74
      %p83 = scmp.eq.s32.totalorder %s21, 0
      %p84 = por %p82, %p83
      %p85 = scmp.ne.s32.totalorder %s73, %s74
      %p86 = scmp.eq.s32.totalorder %s22, 1
      %p87 = por %p85, %p86
      %p89 = scmp.ne.s32.totalorder %s74, %s88
      %p90 = scmp.eq.s32.totalorder %s22, 0
      %p91 = por %p89, %p90
      %s93 = sadd.s32 %s92, 1
      %p96 = scmp.eq.s32.totalorder %s16, 1
      %p97 = scmp.ne.s32.totalorder %s92, %s94
      %p98 = scmp.eq.s32.totalorder %s16, 0
      %p99 = por %p97, %p98
      %p100 = scmp.ne.s32.totalorder %s92, %s94
      %p101 = scmp.eq.s32.totalorder %s21, 1
      %p102 = por %p100, %p101
      %p103 = scmp.ne.s32.totalorder %s94, %s95
      %p104 = scmp.eq.s32.totalorder %s21, 0
      %p105 = por %p103, %p104
      %p106 = scmp.ne.s32.totalorder %s94, %s95
      %p107 = scmp.eq.s32.totalorder %s22, 1
      %p108 = por %p106, %p107
      %p110 = scmp.ne.s32.totalorder %s95, %s109
      %p111 = scmp.eq.s32.totalorder %s22, 0
      %p112 = por %p110, %p111
      %s113 = ssub.s32 %s16, %s23
      %p114 = scmp.eq.s32.totalorder %s113, 0
      %s116 = sadd.s32 %s115, 1
      %s117 = scalar_select %p114, %s115, %s116
      %p120 = pneg %p114
      %p121 = scmp.eq.s32.totalorder %s16, 1
      %p122 = por %p120, %p121
      %p123 = scmp.ne.s32.totalorder %s115, %s118
      %p124 = scmp.eq.s32.totalorder %s16, 0
      %p125 = por %p123, %p124
      %p126 = scmp.ne.s32.totalorder %s115, %s118
      %p127 = scmp.eq.s32.totalorder %s21, 1
      %p128 = por %p126, %p127
      %p129 = scmp.ne.s32.totalorder %s118, %s119
      %p130 = scmp.eq.s32.totalorder %s21, 0
      %p131 = por %p129, %p130
      %p132 = scmp.ne.s32.totalorder %s118, %s119
      %p133 = scmp.eq.s32.totalorder %s22, 1
      %p134 = por %p132, %p133
      %p136 = scmp.ne.s32.totalorder %s119, %s135
      %p137 = scmp.eq.s32.totalorder %s22, 0
      %p138 = por %p136, %p137
      %p139 = scmp.le.s32.totalorder 1, %s16
      %p140 = scmp.lt.s32.totalorder %s16, 3
      %p141 = pnand %p139, %p140
      %p142 = pneg %p141
      // Predicated region
      $region9: #{tpu_custom_call.1} parent=5 // pred_check
        _
      $region10: #{tpu_custom_call.1} parent=5 // pred_check_branch
        %144 = sbr.rel (%p141) target = $region12
      $region11: #{tpu_custom_call.1} parent=5 // pred_region
        %s145 = ssub.s32 %s16, 1
        // Predicated region
        $region13: #{tpu_custom_call.1} parent=11 // pred_check
          %p146 = pneg %p63
        $region14: #{tpu_custom_call.1} parent=11 // pred_check_branch
          %148 = sbr.rel (%p146) target = $region16
        $region15: #{tpu_custom_call.1} parent=11 // pred_region
          _
        $region16: #{tpu_custom_call.1} parent=11 // pred_fallthru
          _
        // Predicated region
        $region17: #{tpu_custom_call.1} parent=11 // pred_check
          %p149 = pneg %p84
        $region18: #{tpu_custom_call.1} parent=11 // pred_check_branch
          %151 = sbr.rel (%p149) target = $region20
        $region19: #{tpu_custom_call.1} parent=11 // pred_region
          _
        $region20: #{tpu_custom_call.1} parent=11 // pred_fallthru
          _
        // Predicated region
        $region21: #{tpu_custom_call.1} parent=11 // pred_check
          %p152 = pneg %p105
        $region22: #{tpu_custom_call.1} parent=11 // pred_check_branch
          %154 = sbr.rel (%p152) target = $region24
        $region23: #{tpu_custom_call.1} parent=11 // pred_region
          _
        $region24: #{tpu_custom_call.1} parent=11 // pred_fallthru
          _
      $region12: #{tpu_custom_call.1} parent=5 // pred_fallthru
        _
      %p155 = scmp.lt.s32.totalorder %s16, 2
      // Predicated region
      $region25: #{tpu_custom_call.1} parent=5 // pred_check
        %p156 = pneg %p155
      $region26: #{tpu_custom_call.1} parent=5 // pred_check_branch
        %158 = sbr.rel (%p156) target = $region28
      $region27: #{tpu_custom_call.1} parent=5 // pred_region
        // Predicated region
        $region29: #{tpu_custom_call.1} parent=27 // pred_check
          %p159 = pneg %p36
        $region30: #{tpu_custom_call.1} parent=27 // pred_check_branch
          %161 = sbr.rel (%p159) target = $region32
        $region31: #{tpu_custom_call.1} parent=27 // pred_region
          %s162 = sand.u32 %s26, 1
          %s163 = scalar_lea.sflag [#allocation3], %s162
          %s164 = sand.u32 %s26, 1
          %s165 = smul.addr %s164, 64
          %s166 = scalar_lea.vmem [#allocation2], %s165
          %s168 = ssub.s32 1024, 1024
          %169 = vsyncadd %s163, %s168
          %s170 = smul.addr %s16, 8
          %s171 = smul.addr %s170, 128
          %s172 = scalar_lea.hbm %s0, %s171
          %s173 = sshll.u32 %s166, 4
          %s174 = int_to_ptr.vmem [resolvable:$true] %s173
          %179 = dma.hbm_to_vmem [thread:$0]  %s172, 1024, %s174, %s163, 256, 256, 16
        $region32: #{tpu_custom_call.1} parent=27 // pred_fallthru
          _
      $region28: #{tpu_custom_call.1} parent=5 // pred_fallthru
        _
      %p180 = scmp.le.s32.totalorder 1, %s16
      %p181 = scmp.lt.s32.totalorder %s16, 3
      %p182 = pnand %p180, %p181
      %p183 = pneg %p182
      // Predicated region
      $region33: #{tpu_custom_call.1} parent=5 // pred_check
        _
      $region34: #{tpu_custom_call.1} parent=5 // pred_check_branch
        %185 = sbr.rel (%p182) target = $region36
      $region35: #{tpu_custom_call.1} parent=5 // pred_region
        %s186 = ssub.s32 %s16, 1
        %s187 = sand.u32 %s29, 1
        %s188 = scalar_lea.sflag [#allocation3], %s187
        %s189 = sand.u32 %s29, 1
        %s190 = smul.addr %s189, 64
        %s191 = scalar_lea.vmem [#allocation2], %s190
        // Predicated region
        $region37: #{tpu_custom_call.1} parent=35 // pred_check
          %p192 = pneg %p42
        $region38: #{tpu_custom_call.1} parent=35 // pred_check_branch
          %194 = sbr.rel (%p192) target = $region40
        $region39: #{tpu_custom_call.1} parent=35 // pred_region
          %195 = dma.done %s188, 1024
        $region40: #{tpu_custom_call.1} parent=35 // pred_fallthru
          _
        %s196 = sand.u32 %s29, 1
        %s197 = scalar_lea.sflag [#allocation3], %s196
        %s198 = sand.u32 %s29, 1
        %s199 = smul.addr %s198, 64
        %s200 = scalar_lea.vmem [#allocation2], %s199
        %p201 = pneg %p42
        %p202 = pneg %p39
        %p203 = pneg %p63
        %p204 = pneg %p60
        %p205 = pneg %p84
        %p206 = pneg %p81
        %p207 = pneg %p105
        %p208 = pneg %p102
        %p209 = pneg %p131
        %p210 = pneg %p128
        %s211 = sand.u32 %s118, 1
        %s212 = scalar_lea.sflag [#allocation4], %s211
        %s213 = sand.u32 %s118, 1
        %s214 = smul.addr %s213, 64
        %s215 = scalar_lea.vmem [#allocation5], %s214
        %v216 = vld [vmem:[%s3] sm:$0x3]
        %v217 = vlaneseq
        %v218 = vand.u32 %v217, 127
        %v219 = vadd.s32 %v218, 128
        %vm220 = vcmp.lt.s32.totalorder %v218, 0
        %v221 = vsub.s32 0, %v218
        %v222 = vsel %vm220, %v221, %v218
        %v223 = vshrl.u32 %v222, 4
        %v224 = vand.u32 %v222, 15
        %v225 = vsub.s32 0, %v224
        %v226 = vsel %vm220, %v225, %v224
        %vm227 = vcmp.lt.s32.totalorder %v219, 0
        %v228 = vsub.s32 0, %v219
        %v229 = vsel %vm227, %v228, %v219
        %v230 = vshrl.u32 %v229, 4
        %v231 = vand.u32 %v229, 15
        %v232 = vsub.s32 0, %v231
        %v233 = vsel %vm227, %v232, %v231
        %vm234 = vcmp.ne.s32.totalorder %v226, 0
        %vm235 = vcmp.ne.s32.totalorder %v233, 0
        %vm236 = vcmp.lt.s32.totalorder %v226, 0
        %vm237 = vcmp.lt.s32.totalorder %v233, 0
        %vm238 = vmand %vm236, %vm234
        %vm239 = vmand %vm237, %vm235
        %v240 = vadd.s32 %v226, 16
        %v241 = vadd.s32 %v233, 16
        %v242 = vsel %vm238, %v240, %v226
        %v243 = vsel %vm239, %v241, %v233
        %v244 = vadd.s32 %v242, 4294967293
        %v245 = vadd.s32 %v243, 4294967293
        %vm246 = vcmp.ge.s32.totalorder %v244, 0
        %vm247 = vcmp.ge.s32.totalorder %v245, 0
        %vm248 = vcmp.lt.s32.totalorder %v244, 16
        %vm249 = vcmp.lt.s32.totalorder %v245, 16
        %vm250 = vmand %vm246, %vm248
        %vm251 = vmand %vm247, %vm249
        %v252 = vadd.s32 %v242, 4294967294
        %v253 = vadd.s32 %v243, 4294967294
        %vm254 = vcmp.ge.s32.totalorder %v252, 0
        %vm255 = vcmp.ge.s32.totalorder %v253, 0
        %vm256 = vcmp.lt.s32.totalorder %v252, 16
        %vm257 = vcmp.lt.s32.totalorder %v253, 16
        %vm258 = vmand %vm254, %vm256
        %vm259 = vmand %vm255, %vm257
        %v260 = vadd.s32 %v242, 4294967295
        %v261 = vadd.s32 %v243, 4294967295
        %vm262 = vcmp.ge.s32.totalorder %v260, 0
        %vm263 = vcmp.ge.s32.totalorder %v261, 0
        %vm264 = vcmp.lt.s32.totalorder %v260, 16
        %vm265 = vcmp.lt.s32.totalorder %v261, 16
        %vm266 = vmand %vm262, %vm264
        %vm267 = vmand %vm263, %vm265
        %vm268 = vcmp.ge.s32.totalorder %v242, 0
        %vm269 = vcmp.ge.s32.totalorder %v243, 0
        %vm270 = vcmp.lt.s32.totalorder %v242, 16
        %vm271 = vcmp.lt.s32.totalorder %v243, 16
        %vm272 = vmand %vm268, %vm270
        %vm273 = vmand %vm269, %vm271
        %v274 = vadd.s32 %v242, 1
        %v275 = vadd.s32 %v243, 1
        %vm276 = vcmp.ge.s32.totalorder %v274, 0
        %vm277 = vcmp.ge.s32.totalorder %v275, 0
        %vm278 = vcmp.lt.s32.totalorder %v274, 16
        %vm279 = vcmp.lt.s32.totalorder %v275, 16
        %vm280 = vmand %vm276, %vm278
        %vm281 = vmand %vm277, %vm279
        %v282 = vadd.s32 %v242, 2
        %v283 = vadd.s32 %v243, 2
        %vm284 = vcmp.ge.s32.totalorder %v282, 0
        %vm285 = vcmp.ge.s32.totalorder %v283, 0
        %vm286 = vcmp.lt.s32.totalorder %v282, 16
        %vm287 = vcmp.lt.s32.totalorder %v283, 16
        %vm288 = vmand %vm284, %vm286
        %vm289 = vmand %vm285, %vm287
        %v290 = vadd.s32 %v242, 3
        %v291 = vadd.s32 %v243, 3
        %vm292 = vcmp.ge.s32.totalorder %v290, 0
        %vm293 = vcmp.ge.s32.totalorder %v291, 0
        %vm294 = vcmp.lt.s32.totalorder %v290, 16
        %vm295 = vcmp.lt.s32.totalorder %v291, 16
        %vm296 = vmand %vm292, %vm294
        %vm297 = vmand %vm293, %vm295
        %v298 = vld [vmem:[%s191] sm:$0xff]
        %v299 = vld [vmem:[%s191 + $0x8] sm:$0xff]
        %v300 = vld [vmem:[%s191 + $0x10] sm:$0xff]
        %v301 = vld [vmem:[%s191 + $0x18] sm:$0xff]
        %v302 = vld [vmem:[%s191 + $0x20] sm:$0xff]
        %v303 = vld [vmem:[%s191 + $0x28] sm:$0xff]
        %v304 = vld [vmem:[%s191 + $0x30] sm:$0xff]
        %v305 = vld [vmem:[%s191 + $0x38] sm:$0xff]
        %v306 = vadd.f32 %v298, %v299
        %307 = vadd.xlane.f32.xlu0 %v306
        %v308 = vpop.xlane.xlu0 %307
        %v309 = vadd.f32 %v300, %v301
        %310 = vadd.xlane.f32.xlu0 %v309
        %v311 = vpop.xlane.xlu0 %310
        %v312 = vadd.f32 %v302, %v303
        %313 = vadd.xlane.f32.xlu0 %v312
        %v314 = vpop.xlane.xlu0 %313
        %v315 = vadd.f32 %v304, %v305
        %316 = vadd.xlane.f32.xlu0 %v315
        %v317 = vpop.xlane.xlu0 %316
        %v318 = vmul.f32 %v308, 0.00390625
        %v319 = vmul.f32 %v311, 0.00390625
        %v320 = vmul.f32 %v314, 0.00390625
        %v321 = vmul.f32 %v317, 0.00390625
        %v322 = vmax.f32 %v298, %v299
        %323 = vmax.xlane.f32.xlu0 %v322
        %v324 = vpop.xlane.xlu0 %323
        %v325 = vmax.f32 %v300, %v301
        %326 = vmax.xlane.f32.xlu0 %v325
        %v327 = vpop.xlane.xlu0 %326
        %v328 = vmax.f32 %v302, %v303
        %329 = vmax.xlane.f32.xlu0 %v328
        %v330 = vpop.xlane.xlu0 %329
        %v331 = vmax.f32 %v304, %v305
        %332 = vmax.xlane.f32.xlu0 %v331
        %v333 = vpop.xlane.xlu0 %332
        %vm334 = vcmask 7168
        %v335 = vsel %vm334, %v318, %v324
        %v336 = vsel %vm334, %v319, %v327
        %v337 = vsel %vm334, %v320, %v330
        %v338 = vsel %vm334, %v321, %v333
        %v339 = vld [vmem:[%s1] sm:$0x3]
        %vm340 = vcmask 261120
        %v342 = vsel %vm340, %v339, 0
        %344 = vmatprep.subr.mxu0 0.0
        %345 = vmatpush1.msra.mxu0 %v335
        %346 = vmatprep.subr.mxu0 0.0
        %347 = vmatpush1.msra.mxu0 %v336
        %348 = vmatprep.subr.mxu0 0.0
        %349 = vmatpush1.msra.mxu0 %v337
        %350 = vmatprep.subr.mxu0 0.0
        %351 = vmatpush1.msra.mxu0 %v338
        %352 = vmatprep.subr.mxu0 0.0
        %353 = vmatpush1.msra.mxu0 0.0
        %354 = vmatprep.subr.mxu0 0.0
        %355 = vmatpush1.msra.mxu0 0.0
        %356 = vmatprep.subr.mxu0 0.0
        %357 = vmatpush1.msra.mxu0 0.0
        %358 = vmatprep.subr.mxu0 0.0
        %359 = vmatpush1.msra.mxu0 0.0
        %360 = vmatprep.subr.mxu0 0.0
        %361 = vmatpush1.msra.mxu0 0.0
        %362 = vmatprep.subr.mxu0 0.0
        %363 = vmatpush1.msra.mxu0 0.0
        %364 = vmatprep.subr.mxu0 0.0
        %365 = vmatpush1.msra.mxu0 0.0
        %366 = vmatprep.subr.mxu0 0.0
        %367 = vmatpush1.msra.mxu0 0.0
        %368 = vmatprep.subr.mxu0 0.0
        %369 = vmatpush1.msra.mxu0 0.0
        %370 = vmatprep.subr.mxu0 0.0
        %371 = vmatpush1.msra.mxu0 0.0
        %372 = vmatprep.subr.mxu0 0.0
        %373 = vmatpush1.msra.mxu0 0.0
        %374 = vmatprep.subr.mxu0 0.0
        %375 = vmatpush1.msra.mxu0 0.0
        %376 = vmatprep.subr.mxu0 0.0
        %377 = vmatpush1.msra.mxu0 0.0
        %378 = vmatprep.subr.mxu0 0.0
        %379 = vmatpush1.msra.mxu0 0.0
        %380 = vmatprep.subr.mxu0 0.0
        %381 = vmatpush1.msra.mxu0 0.0
        %382 = vmatprep.subr.mxu0 0.0
        %383 = vmatpush1.msra.mxu0 0.0
        %384 = vmatprep.subr.mxu0 0.0
        %385 = vmatpush1.msra.mxu0 0.0
        %386 = vmatprep.subr.mxu0 0.0
        %387 = vmatpush1.msra.mxu0 0.0
        %388 = vmatprep.subr.mxu0 0.0
        %389 = vmatpush1.msra.mxu0 0.0
        %390 = vmatprep.subr.mxu0 0.0
        %391 = vmatpush1.msra.mxu0 0.0
        %392 = vmatprep.subr.mxu0 0.0
        %393 = vmatpush1.msra.mxu0 0.0
        %394 = vmatprep.subr.mxu0 0.0
        %395 = vmatpush1.msra.mxu0 0.0
        %396 = vmatprep.subr.mxu0 0.0
        %397 = vmatpush1.msra.mxu0 0.0
        %398 = vmatprep.subr.mxu0 0.0
        %399 = vmatpush1.msra.mxu0 0.0
        %400 = vmatprep.subr.mxu0 0.0
        %401 = vmatpush1.msra.mxu0 0.0
        %402 = vmatprep.subr.mxu0 0.0
        %403 = vmatpush1.msra.mxu0 0.0
        %404 = vmatprep.subr.mxu0 0.0
        %405 = vmatpush1.msra.mxu0 0.0
        %406 = vmatprep.subr.mxu0 0.0
        %407 = vmatpush1.msra.mxu0 0.0
        %408 = vmatprep.mubr.f32.mxu0 0.0
        %409 = vmatmul.mubr.f32.gmra.mrb[0].mxu0 %v342
        %v410 = vpop.f32.mrb[0].mxu0
        %v411 = vadd.f32 0.0, %v410
        %v412 = vpop.f32.mrb[0].mxu0
        %413 = vdwg.mxu0
        %v414 = vmax.f32 %v411, 0.0
        %v415 = vld [vmem:[%s2] sm:$0xff]
        %v416 = vld [vmem:[%s2 + $0x8] sm:$0xff]
        %v417 = vld [vmem:[%s2 + $0x10] sm:$0xff]
        %v418 = vld [vmem:[%s2 + $0x18] sm:$0xff]
        %vm419 = vcmask 15360
        %v421 = vsel %vm419, %v415, 0
        %v424 = vsel %vm419, %v416, 0
        %v427 = vsel %vm419, %v417, 0
        %v430 = vsel %vm419, %v418, 0
        %vm432 = vcmask 1041408
        %v434 = vsel %vm432, %v414, 0
        %436 = vmatprep.subr.mxu0 0.0
        %437 = vmatpush1.msra.mxu0 %v434
        %438 = vmatprep.subr.mxu0 0.0
        %439 = vmatpush1.msra.mxu0 0.0
        %440 = vmatprep.subr.mxu0 0.0
        %441 = vmatpush1.msra.mxu0 0.0
        %442 = vmatprep.subr.mxu0 0.0
        %443 = vmatpush1.msra.mxu0 0.0
        %444 = vmatprep.subr.mxu0 0.0
        %445 = vmatpush1.msra.mxu0 0.0
        %446 = vmatprep.subr.mxu0 0.0
        %447 = vmatpush1.msra.mxu0 0.0
        %448 = vmatprep.subr.mxu0 0.0
        %449 = vmatpush1.msra.mxu0 0.0
        %450 = vmatprep.subr.mxu0 0.0
        %451 = vmatpush1.msra.mxu0 0.0
        %452 = vmatprep.subr.mxu0 0.0
        %453 = vmatpush1.msra.mxu0 0.0
        %454 = vmatprep.subr.mxu0 0.0
        %455 = vmatpush1.msra.mxu0 0.0
        %456 = vmatprep.subr.mxu0 0.0
        %457 = vmatpush1.msra.mxu0 0.0
        %458 = vmatprep.subr.mxu0 0.0
        %459 = vmatpush1.msra.mxu0 0.0
        %460 = vmatprep.subr.mxu0 0.0
        %461 = vmatpush1.msra.mxu0 0.0
        %462 = vmatprep.subr.mxu0 0.0
        %463 = vmatpush1.msra.mxu0 0.0
        %464 = vmatprep.subr.mxu0 0.0
        %465 = vmatpush1.msra.mxu0 0.0
        %466 = vmatprep.subr.mxu0 0.0
        %467 = vmatpush1.msra.mxu0 0.0
        %468 = vmatprep.subr.mxu0 0.0
        %469 = vmatpush1.msra.mxu0 0.0
        %470 = vmatprep.subr.mxu0 0.0
        %471 = vmatpush1.msra.mxu0 0.0
        %472 = vmatprep.subr.mxu0 0.0
        %473 = vmatpush1.msra.mxu0 0.0
        %474 = vmatprep.subr.mxu0 0.0
        %475 = vmatpush1.msra.mxu0 0.0
        %476 = vmatprep.subr.mxu0 0.0
        %477 = vmatpush1.msra.mxu0 0.0
        %478 = vmatprep.subr.mxu0 0.0
        %479 = vmatpush1.msra.mxu0 0.0
        %480 = vmatprep.subr.mxu0 0.0
        %481 = vmatpush1.msra.mxu0 0.0
        %482 = vmatprep.subr.mxu0 0.0
        %483 = vmatpush1.msra.mxu0 0.0
        %484 = vmatprep.subr.mxu0 0.0
        %485 = vmatpush1.msra.mxu0 0.0
        %486 = vmatprep.subr.mxu0 0.0
        %487 = vmatpush1.msra.mxu0 0.0
        %488 = vmatprep.subr.mxu0 0.0
        %489 = vmatpush1.msra.mxu0 0.0
        %490 = vmatprep.subr.mxu0 0.0
        %491 = vmatpush1.msra.mxu0 0.0
        %492 = vmatprep.subr.mxu0 0.0
        %493 = vmatpush1.msra.mxu0 0.0
        %494 = vmatprep.subr.mxu0 0.0
        %495 = vmatpush1.msra.mxu0 0.0
        %496 = vmatprep.subr.mxu0 0.0
        %497 = vmatpush1.msra.mxu0 0.0
        %498 = vmatprep.subr.mxu0 0.0
        %499 = vmatpush1.msra.mxu0 0.0
        %500 = vmatprep.mubr.f32.mxu0 0.0
        %501 = vmatmul.mubr.f32.gmra.mrb[0].mxu0 %v421
        %v502 = vpop.f32.mrb[0].mxu0
        %v503 = vadd.f32 0.0, %v502
        %v504 = vpop.f32.mrb[0].mxu0
        %505 = vmatprep.mubr.f32.mxu0 0.0
        %506 = vmatmul.mubr.f32.gmra.mrb[0].mxu0 %v424
        %v507 = vpop.f32.mrb[0].mxu0
        %v508 = vadd.f32 0.0, %v507
        %v509 = vpop.f32.mrb[0].mxu0
        %510 = vmatprep.mubr.f32.mxu0 0.0
        %511 = vmatmul.mubr.f32.gmra.mrb[0].mxu0 %v427
        %v512 = vpop.f32.mrb[0].mxu0
        %v513 = vadd.f32 0.0, %v512
        %v514 = vpop.f32.mrb[0].mxu0
        %515 = vmatprep.mubr.f32.mxu0 0.0
        %516 = vmatmul.mubr.f32.gmra.mrb[0].mxu0 %v430
        %v517 = vpop.f32.mrb[0].mxu0
        %v518 = vadd.f32 0.0, %v517
        %v519 = vpop.f32.mrb[0].mxu0
        %520 = vdwg.mxu0
        %525 = vrot.lane.b32.xlu0 %v503, 127
        %v526 = vpop.permute.xlu0 %525
        %527 = vrot.lane.b32.xlu0 %v508, 127
        %v528 = vpop.permute.xlu0 %527
        %529 = vrot.lane.b32.xlu0 %v513, 127
        %v530 = vpop.permute.xlu0 %529
        %531 = vrot.lane.b32.xlu0 %v518, 127
        %v532 = vpop.permute.xlu0 %531
        %v537 = vadd.f32 %v503, %v526
        %v538 = vadd.f32 %v508, %v528
        %v539 = vadd.f32 %v513, %v530
        %v540 = vadd.f32 %v518, %v532
        %v541 = vxor.u32 %v537, 2147483648
        %v542 = vxor.u32 %v538, 2147483648
        %v543 = vxor.u32 %v539, 2147483648
        %v544 = vxor.u32 %v540, 2147483648
        %v545 = vmul.f32 %v541, 1.442695
        %v546 = vpow.pop %v545
        %v547 = vmul.f32 %v542, 1.442695
        %v548 = vpow.pop %v547
        %v549 = vmul.f32 %v543, 1.442695
        %v550 = vpow.pop %v549
        %v551 = vmul.f32 %v544, 1.442695
        %v552 = vpow.pop %v551
        %v553 = vadd.f32 %v546, 1.0
        %v554 = vadd.f32 %v548, 1.0
        %v555 = vadd.f32 %v550, 1.0
        %v556 = vadd.f32 %v552, 1.0
        %v557 = vrcp.pop %v553
        %v558 = vmul.f32 1.0, %v557
        %v559 = vrcp.pop %v554
        %v560 = vmul.f32 1.0, %v559
        %v561 = vrcp.pop %v555
        %v562 = vmul.f32 1.0, %v561
        %v563 = vrcp.pop %v556
        %v564 = vmul.f32 1.0, %v563
        %566 = vset.pattern.permute.xlu0 0
        %567 = vperm.xlu0 %566, %v558
        %v568 = vpop.permute.xlu0 %567
        %571 = vset.pattern.permute.xlu0 0
        %572 = vperm.xlu0 %571, %v560
        %v573 = vpop.permute.xlu0 %572
        %576 = vset.pattern.permute.xlu0 0
        %577 = vperm.xlu0 %576, %v562
        %v578 = vpop.permute.xlu0 %577
        %581 = vset.pattern.permute.xlu0 0
        %582 = vperm.xlu0 %581, %v564
        %v583 = vpop.permute.xlu0 %582
        %v585 = vmul.f32 %v568, %v298
        %v586 = vmul.f32 %v568, %v299
        %v587 = vmul.f32 %v573, %v300
        %v588 = vmul.f32 %v573, %v301
        %v589 = vmul.f32 %v578, %v302
        %v590 = vmul.f32 %v578, %v303
        %v591 = vmul.f32 %v583, %v304
        %v592 = vmul.f32 %v583, %v305
        %v593 = vadd.f32 %v585, %v587
        %v594 = vadd.f32 %v593, %v589
        %v595 = vadd.f32 %v594, %v591
        %v596 = vrot.slane %v595, 4
        %v597 = vadd.f32 %v595, %v596
        %v598 = vrot.slane %v597, 2
        %v599 = vadd.f32 %v597, %v598
        %v600 = vrot.slane %v599, 1
        %v601 = vadd.f32 %v599, %v600
        %v602 = vadd.f32 %v586, %v588
        %v603 = vadd.f32 %v602, %v590
        %v604 = vadd.f32 %v603, %v592
        %v605 = vrot.slane %v604, 4
        %v606 = vadd.f32 %v604, %v605
        %v607 = vrot.slane %v606, 2
        %v608 = vadd.f32 %v606, %v607
        %v609 = vrot.slane %v608, 1
        %v610 = vadd.f32 %v608, %v609
        %v611 = vadd.f32 %v601, 0.0
        %v612 = vadd.f32 %v610, 0.0
        %v613 = vmax.f32 %v585, %v589
        %v614 = vmax.f32 %v587, %v591
        %v615 = vmax.f32 %v613, %v614
        %v616 = vrot.slane %v615, 4
        %v617 = vmax.f32 %v615, %v616
        %v618 = vrot.slane %v617, 2
        %v619 = vmax.f32 %v617, %v618
        %v620 = vrot.slane %v619, 1
        %v621 = vmax.f32 %v619, %v620
        %v622 = vmax.f32 %v586, %v590
        %v623 = vmax.f32 %v588, %v592
        %v624 = vmax.f32 %v622, %v623
        %v625 = vrot.slane %v624, 4
        %v626 = vmax.f32 %v624, %v625
        %v627 = vrot.slane %v626, 2
        %v628 = vmax.f32 %v626, %v627
        %v629 = vrot.slane %v628, 1
        %v630 = vmax.f32 %v628, %v629
        %v631 = vmul.f32 %v611, 0.03125
        %v632 = vmul.f32 %v612, 0.03125
        %vm633 = vcmask 1040384
        %v634 = vsel %vm633, %v631, %v621
        %v635 = vsel %vm633, %v632, %v630
        %638 = vrot.lane.b32.xlu0 %v634, 3
        %v639 = vpop.permute.xlu0 %638
        %640 = vrot.lane.b32.xlu0 %v635, 3
        %v641 = vpop.permute.xlu0 %640
        %vm642 = vcmask 23552
        %v643 = vsel %vm642, %v639, %v641
        %v647 = vsel %vm642, 0.0, %v639
        %v648 = vsel %vm642, %v641, 0.0
        %v649 = vsel %vm250, 1, 0
        %v650 = vsel %vm251, 1, 0
        %vm651 = vcmp.eq.s32.totalorder %v649, 1
        %vm652 = vcmp.eq.s32.totalorder %v650, 1
        %v653 = vsel %vm651, %v647, 0.0
        %v654 = vsel %vm652, %v643, 0.0
        %657 = vrot.lane.b32.xlu0 %v653, 48
        %v658 = vpop.permute.xlu0 %657
        %659 = vrot.lane.b32.xlu0 %v654, 48
        %v660 = vpop.permute.xlu0 %659
        %vm661 = vcmask 392192
        %v662 = vsel %vm661, %v658, %v660
        %v666 = vsel %vm661, 0.0, %v658
        %v667 = vsel %vm661, %v660, 0.0
        %v668 = vsel %vm258, 1, 0
        %v669 = vsel %vm259, 1, 0
        %vm670 = vcmp.eq.s32.totalorder %v668, 1
        %vm671 = vcmp.eq.s32.totalorder %v669, 1
        %674 = vrot.lane.b32.xlu0 %v647, 127
        %v675 = vpop.permute.xlu0 %674
        %676 = vrot.lane.b32.xlu0 %v643, 127
        %v677 = vpop.permute.xlu0 %676
        %678 = vrot.lane.b32.xlu0 %v648, 127
        %v679 = vpop.permute.xlu0 %678
        %vm680 = vcmask 1039360
        %v681 = vsel %vm680, %v675, %v677
        %v682 = vsel %vm680, %v677, %v679
        %v685 = vsel %vm670, %v681, 0.0
        %v686 = vsel %vm671, %v682, 0.0
        %689 = vrot.lane.b32.xlu0 %v685, 48
        %v690 = vpop.permute.xlu0 %689
        %691 = vrot.lane.b32.xlu0 %v686, 48
        %v692 = vpop.permute.xlu0 %691
        %v693 = vsel %vm661, %v690, %v692
        %v697 = vsel %vm661, 0.0, %v690
        %v698 = vsel %vm661, %v692, 0.0
        %v699 = vsel %vm266, 1, 0
        %v700 = vsel %vm267, 1, 0
        %vm701 = vcmp.eq.s32.totalorder %v699, 1
        %vm702 = vcmp.eq.s32.totalorder %v700, 1
        %703 = vrot.lane.b32.xlu0 %v647, 126
        %v704 = vpop.permute.xlu0 %703
        %705 = vrot.lane.b32.xlu0 %v643, 126
        %v706 = vpop.permute.xlu0 %705
        %707 = vrot.lane.b32.xlu0 %v648, 126
        %v708 = vpop.permute.xlu0 %707
        %vm709 = vcmask 1031168
        %v710 = vsel %vm709, %v704, %v706
        %v711 = vsel %vm709, %v706, %v708
        %v714 = vsel %vm701, %v710, 0.0
        %v715 = vsel %vm702, %v711, 0.0
        %718 = vrot.lane.b32.xlu0 %v714, 48
        %v719 = vpop.permute.xlu0 %718
        %720 = vrot.lane.b32.xlu0 %v715, 48
        %v721 = vpop.permute.xlu0 %720
        %v722 = vsel %vm661, %v719, %v721
        %v726 = vsel %vm661, 0.0, %v719
        %v727 = vsel %vm661, %v721, 0.0
        %v728 = vsel %vm272, 1, 0
        %v729 = vsel %vm273, 1, 0
        %vm730 = vcmp.eq.s32.totalorder %v728, 1
        %vm731 = vcmp.eq.s32.totalorder %v729, 1
        %732 = vrot.lane.b32.xlu0 %v647, 125
        %v733 = vpop.permute.xlu0 %732
        %734 = vrot.lane.b32.xlu0 %v643, 125
        %v735 = vpop.permute.xlu0 %734
        %736 = vrot.lane.b32.xlu0 %v648, 125
        %v737 = vpop.permute.xlu0 %736
        %vm738 = vcmask 1022976
        %v739 = vsel %vm738, %v733, %v735
        %v740 = vsel %vm738, %v735, %v737
        %v743 = vsel %vm730, %v739, 0.0
        %v744 = vsel %vm731, %v740, 0.0
        %747 = vrot.lane.b32.xlu0 %v743, 48
        %v748 = vpop.permute.xlu0 %747
        %749 = vrot.lane.b32.xlu0 %v744, 48
        %v750 = vpop.permute.xlu0 %749
        %v751 = vsel %vm661, %v748, %v750
        %v755 = vsel %vm661, 0.0, %v748
        %v756 = vsel %vm661, %v750, 0.0
        %v757 = vsel %vm280, 1, 0
        %v758 = vsel %vm281, 1, 0
        %vm759 = vcmp.eq.s32.totalorder %v757, 1
        %vm760 = vcmp.eq.s32.totalorder %v758, 1
        %761 = vrot.lane.b32.xlu0 %v647, 124
        %v762 = vpop.permute.xlu0 %761
        %763 = vrot.lane.b32.xlu0 %v643, 124
        %v764 = vpop.permute.xlu0 %763
        %765 = vrot.lane.b32.xlu0 %v648, 124
        %v766 = vpop.permute.xlu0 %765
        %vm767 = vcmask 1014784
        %v768 = vsel %vm767, %v762, %v764
        %v769 = vsel %vm767, %v764, %v766
        %v772 = vsel %vm759, %v768, 0.0
        %v773 = vsel %vm760, %v769, 0.0
        %776 = vrot.lane.b32.xlu0 %v772, 48
        %v777 = vpop.permute.xlu0 %776
        %778 = vrot.lane.b32.xlu0 %v773, 48
        %v779 = vpop.permute.xlu0 %778
        %v780 = vsel %vm661, %v777, %v779
        %v784 = vsel %vm661, 0.0, %v777
        %v785 = vsel %vm661, %v779, 0.0
        %v786 = vsel %vm288, 1, 0
        %v787 = vsel %vm289, 1, 0
        %vm788 = vcmp.eq.s32.totalorder %v786, 1
        %vm789 = vcmp.eq.s32.totalorder %v787, 1
        %790 = vrot.lane.b32.xlu0 %v647, 123
        %v791 = vpop.permute.xlu0 %790
        %792 = vrot.lane.b32.xlu0 %v643, 123
        %v793 = vpop.permute.xlu0 %792
        %794 = vrot.lane.b32.xlu0 %v648, 123
        %v795 = vpop.permute.xlu0 %794
        %vm796 = vcmask 1006592
        %v797 = vsel %vm796, %v791, %v793
        %v798 = vsel %vm796, %v793, %v795
        %v801 = vsel %vm788, %v797, 0.0
        %v802 = vsel %vm789, %v798, 0.0
        %805 = vrot.lane.b32.xlu0 %v801, 48
        %v806 = vpop.permute.xlu0 %805
        %807 = vrot.lane.b32.xlu0 %v802, 48
        %v808 = vpop.permute.xlu0 %807
        %v809 = vsel %vm661, %v806, %v808
        %v813 = vsel %vm661, 0.0, %v806
        %v814 = vsel %vm661, %v808, 0.0
        %v815 = vsel %vm296, 1, 0
        %v816 = vsel %vm297, 1, 0
        %vm817 = vcmp.eq.s32.totalorder %v815, 1
        %vm818 = vcmp.eq.s32.totalorder %v816, 1
        %819 = vrot.lane.b32.xlu0 %v647, 122
        %v820 = vpop.permute.xlu0 %819
        %821 = vrot.lane.b32.xlu0 %v643, 122
        %v822 = vpop.permute.xlu0 %821
        %823 = vrot.lane.b32.xlu0 %v648, 122
        %v824 = vpop.permute.xlu0 %823
        %vm825 = vcmask 998400
        %v826 = vsel %vm825, %v820, %v822
        %v827 = vsel %vm825, %v822, %v824
        %v830 = vsel %vm817, %v826, 0.0
        %v831 = vsel %vm818, %v827, 0.0
        %834 = vrot.lane.b32.xlu0 %v830, 48
        %v835 = vpop.permute.xlu0 %834
        %836 = vrot.lane.b32.xlu0 %v831, 48
        %v837 = vpop.permute.xlu0 %836
        %v838 = vsel %vm661, %v835, %v837
        %v842 = vsel %vm661, 0.0, %v835
        %v843 = vsel %vm661, %v837, 0.0
        %845 = vset.pattern.permute.xlu0 0
        %846 = vperm.xlu0 %845, %v216
        %v847 = vpop.permute.xlu0 %846
        %v849 = vmul.f32 %v847, %v666
        %v850 = vmul.f32 %v847, %v662
        %v851 = vadd.f32 %v849, 0.0
        %v852 = vadd.f32 %v850, 0.0
        %853 = vset.pattern.permute.xlu0 1
        %854 = vperm.xlu0 %853, %v216
        %v855 = vpop.permute.xlu0 %854
        %v857 = vmul.f32 %v855, %v697
        %v858 = vmul.f32 %v855, %v693
        %v859 = vadd.f32 %v857, 0.0
        %v860 = vadd.f32 %v858, 0.0
        %861 = vset.pattern.permute.xlu0 2
        %862 = vperm.xlu0 %861, %v216
        %v863 = vpop.permute.xlu0 %862
        %v865 = vmul.f32 %v863, %v726
        %v866 = vmul.f32 %v863, %v722
        %v867 = vadd.f32 %v865, 0.0
        %v868 = vadd.f32 %v866, 0.0
        %869 = vset.pattern.permute.xlu0 3
        %870 = vperm.xlu0 %869, %v216
        %v871 = vpop.permute.xlu0 %870
        %v873 = vmul.f32 %v871, %v755
        %v874 = vmul.f32 %v871, %v751
        %v875 = vadd.f32 %v873, 0.0
        %v876 = vadd.f32 %v874, 0.0
        %877 = vset.pattern.permute.xlu0 4
        %878 = vperm.xlu0 %877, %v216
        %v879 = vpop.permute.xlu0 %878
        %v881 = vmul.f32 %v879, %v784
        %v882 = vmul.f32 %v879, %v780
        %v883 = vadd.f32 %v851, %v881
        %v884 = vadd.f32 %v852, %v882
        %885 = vset.pattern.permute.xlu0 5
        %886 = vperm.xlu0 %885, %v216
        %v887 = vpop.permute.xlu0 %886
        %v889 = vmul.f32 %v887, %v813
        %v890 = vmul.f32 %v887, %v809
        %v891 = vadd.f32 %v859, %v889
        %v892 = vadd.f32 %v860, %v890
        %893 = vset.pattern.permute.xlu0 6
        %894 = vperm.xlu0 %893, %v216
        %v895 = vpop.permute.xlu0 %894
        %v897 = vmul.f32 %v895, %v842
        %v898 = vmul.f32 %v895, %v838
        %v899 = vadd.f32 %v867, %v897
        %v900 = vadd.f32 %v868, %v898
        %901 = vset.pattern.permute.xlu0 7
        %902 = vperm.xlu0 %901, %v216
        %v903 = vpop.permute.xlu0 %902
        %v905 = vmul.f32 %v903, %v666
        %v906 = vmul.f32 %v903, %v662
        %v907 = vmul.f32 %v903, %v667
        %911 = vrot.lane.b32.xlu0 %v905, 112
        %v912 = vpop.permute.xlu0 %911
        %913 = vrot.lane.b32.xlu0 %v906, 112
        %v914 = vpop.permute.xlu0 %913
        %915 = vrot.lane.b32.xlu0 %v907, 112
        %v916 = vpop.permute.xlu0 %915
        %vm917 = vcmask 916480
        %v918 = vsel %vm917, %v912, %v914
        %v919 = vsel %vm917, %v914, %v916
        %v922 = vadd.f32 %v875, %v918
        %v923 = vadd.f32 %v876, %v919
        %924 = vset.pattern.permute.xlu0 8
        %925 = vperm.xlu0 %924, %v216
        %v926 = vpop.permute.xlu0 %925
        %v928 = vmul.f32 %v926, %v697
        %v929 = vmul.f32 %v926, %v693
        %v930 = vmul.f32 %v926, %v698
        %934 = vrot.lane.b32.xlu0 %v928, 112
        %v935 = vpop.permute.xlu0 %934
        %936 = vrot.lane.b32.xlu0 %v929, 112
        %v937 = vpop.permute.xlu0 %936
        %938 = vrot.lane.b32.xlu0 %v930, 112
        %v939 = vpop.permute.xlu0 %938
        %v940 = vsel %vm917, %v935, %v937
        %v941 = vsel %vm917, %v937, %v939
        %v944 = vadd.f32 %v883, %v940
        %v945 = vadd.f32 %v884, %v941
        %946 = vset.pattern.permute.xlu0 9
        %947 = vperm.xlu0 %946, %v216
        %v948 = vpop.permute.xlu0 %947
        %v950 = vmul.f32 %v948, %v726
        %v951 = vmul.f32 %v948, %v722
        %v952 = vmul.f32 %v948, %v727
        %956 = vrot.lane.b32.xlu0 %v950, 112
        %v957 = vpop.permute.xlu0 %956
        %958 = vrot.lane.b32.xlu0 %v951, 112
        %v959 = vpop.permute.xlu0 %958
        %960 = vrot.lane.b32.xlu0 %v952, 112
        %v961 = vpop.permute.xlu0 %960
        %v962 = vsel %vm917, %v957, %v959
        %v963 = vsel %vm917, %v959, %v961
        %v966 = vadd.f32 %v891, %v962
        %v967 = vadd.f32 %v892, %v963
        %968 = vset.pattern.permute.xlu0 10
        %969 = vperm.xlu0 %968, %v216
        %v970 = vpop.permute.xlu0 %969
        %v972 = vmul.f32 %v970, %v755
        %v973 = vmul.f32 %v970, %v751
        %v974 = vmul.f32 %v970, %v756
        %978 = vrot.lane.b32.xlu0 %v972, 112
        %v979 = vpop.permute.xlu0 %978
        %980 = vrot.lane.b32.xlu0 %v973, 112
        %v981 = vpop.permute.xlu0 %980
        %982 = vrot.lane.b32.xlu0 %v974, 112
        %v983 = vpop.permute.xlu0 %982
        %v984 = vsel %vm917, %v979, %v981
        %v985 = vsel %vm917, %v981, %v983
        %v988 = vadd.f32 %v899, %v984
        %v989 = vadd.f32 %v900, %v985
        %990 = vset.pattern.permute.xlu0 11
        %991 = vperm.xlu0 %990, %v216
        %v992 = vpop.permute.xlu0 %991
        %v994 = vmul.f32 %v992, %v784
        %v995 = vmul.f32 %v992, %v780
        %v996 = vmul.f32 %v992, %v785
        %1000 = vrot.lane.b32.xlu0 %v994, 112
        %v1001 = vpop.permute.xlu0 %1000
        %1002 = vrot.lane.b32.xlu0 %v995, 112
        %v1003 = vpop.permute.xlu0 %1002
        %1004 = vrot.lane.b32.xlu0 %v996, 112
        %v1005 = vpop.permute.xlu0 %1004
        %v1006 = vsel %vm917, %v1001, %v1003
        %v1007 = vsel %vm917, %v1003, %v1005
        %v1010 = vadd.f32 %v922, %v1006
        %v1011 = vadd.f32 %v923, %v1007
        %1012 = vset.pattern.permute.xlu0 12
        %1013 = vperm.xlu0 %1012, %v216
        %v1014 = vpop.permute.xlu0 %1013
        %v1016 = vmul.f32 %v1014, %v813
        %v1017 = vmul.f32 %v1014, %v809
        %v1018 = vmul.f32 %v1014, %v814
        %1022 = vrot.lane.b32.xlu0 %v1016, 112
        %v1023 = vpop.permute.xlu0 %1022
        %1024 = vrot.lane.b32.xlu0 %v1017, 112
        %v1025 = vpop.permute.xlu0 %1024
        %1026 = vrot.lane.b32.xlu0 %v1018, 112
        %v1027 = vpop.permute.xlu0 %1026
        %v1028 = vsel %vm917, %v1023, %v1025
        %v1029 = vsel %vm917, %v1025, %v1027
        %v1032 = vadd.f32 %v944, %v1028
        %v1033 = vadd.f32 %v945, %v1029
        %1034 = vset.pattern.permute.xlu0 13
        %1035 = vperm.xlu0 %1034, %v216
        %v1036 = vpop.permute.xlu0 %1035
        %v1038 = vmul.f32 %v1036, %v842
        %v1039 = vmul.f32 %v1036, %v838
        %v1040 = vmul.f32 %v1036, %v843
        %1044 = vrot.lane.b32.xlu0 %v1038, 112
        %v1045 = vpop.permute.xlu0 %1044
        %1046 = vrot.lane.b32.xlu0 %v1039, 112
        %v1047 = vpop.permute.xlu0 %1046
        %1048 = vrot.lane.b32.xlu0 %v1040, 112
        %v1049 = vpop.permute.xlu0 %1048
        %v1050 = vsel %vm917, %v1045, %v1047
        %v1051 = vsel %vm917, %v1047, %v1049
        %v1054 = vadd.f32 %v966, %v1050
        %v1055 = vadd.f32 %v967, %v1051
        %1056 = vset.pattern.permute.xlu0 14
        %1057 = vperm.xlu0 %1056, %v216
        %v1058 = vpop.permute.xlu0 %1057
        %v1060 = vmul.f32 %v1058, %v666
        %v1061 = vmul.f32 %v1058, %v662
        %v1062 = vmul.f32 %v1058, %v667
        %1066 = vrot.lane.b32.xlu0 %v1060, 96
        %v1067 = vpop.permute.xlu0 %1066
        %1068 = vrot.lane.b32.xlu0 %v1061, 96
        %v1069 = vpop.permute.xlu0 %1068
        %1070 = vrot.lane.b32.xlu0 %v1062, 96
        %v1071 = vpop.permute.xlu0 %1070
        %vm1072 = vcmask 785408
        %v1073 = vsel %vm1072, %v1067, %v1069
        %v1074 = vsel %vm1072, %v1069, %v1071
        %v1077 = vadd.f32 %v988, %v1073
        %v1078 = vadd.f32 %v989, %v1074
        %1079 = vset.pattern.permute.xlu0 15
        %1080 = vperm.xlu0 %1079, %v216
        %v1081 = vpop.permute.xlu0 %1080
        %v1083 = vmul.f32 %v1081, %v697
        %v1084 = vmul.f32 %v1081, %v693
        %v1085 = vmul.f32 %v1081, %v698
        %1089 = vrot.lane.b32.xlu0 %v1083, 96
        %v1090 = vpop.permute.xlu0 %1089
        %1091 = vrot.lane.b32.xlu0 %v1084, 96
        %v1092 = vpop.permute.xlu0 %1091
        %1093 = vrot.lane.b32.xlu0 %v1085, 96
        %v1094 = vpop.permute.xlu0 %1093
        %v1095 = vsel %vm1072, %v1090, %v1092
        %v1096 = vsel %vm1072, %v1092, %v1094
        %v1099 = vadd.f32 %v1010, %v1095
        %v1100 = vadd.f32 %v1011, %v1096
        %1101 = vset.pattern.permute.xlu0 16
        %1102 = vperm.xlu0 %1101, %v216
        %v1103 = vpop.permute.xlu0 %1102
        %v1105 = vmul.f32 %v1103, %v726
        %v1106 = vmul.f32 %v1103, %v722
        %v1107 = vmul.f32 %v1103, %v727
        %1111 = vrot.lane.b32.xlu0 %v1105, 96
        %v1112 = vpop.permute.xlu0 %1111
        %1113 = vrot.lane.b32.xlu0 %v1106, 96
        %v1114 = vpop.permute.xlu0 %1113
        %1115 = vrot.lane.b32.xlu0 %v1107, 96
        %v1116 = vpop.permute.xlu0 %1115
        %v1117 = vsel %vm1072, %v1112, %v1114
        %v1118 = vsel %vm1072, %v1114, %v1116
        %v1121 = vadd.f32 %v1032, %v1117
        %v1122 = vadd.f32 %v1033, %v1118
        %1123 = vset.pattern.permute.xlu0 17
        %1124 = vperm.xlu0 %1123, %v216
        %v1125 = vpop.permute.xlu0 %1124
        %v1127 = vmul.f32 %v1125, %v755
        %v1128 = vmul.f32 %v1125, %v751
        %v1129 = vmul.f32 %v1125, %v756
        %1133 = vrot.lane.b32.xlu0 %v1127, 96
        %v1134 = vpop.permute.xlu0 %1133
        %1135 = vrot.lane.b32.xlu0 %v1128, 96
        %v1136 = vpop.permute.xlu0 %1135
        %1137 = vrot.lane.b32.xlu0 %v1129, 96
        %v1138 = vpop.permute.xlu0 %1137
        %v1139 = vsel %vm1072, %v1134, %v1136
        %v1140 = vsel %vm1072, %v1136, %v1138
        %v1143 = vadd.f32 %v1054, %v1139
        %v1144 = vadd.f32 %v1055, %v1140
        %1145 = vset.pattern.permute.xlu0 18
        %1146 = vperm.xlu0 %1145, %v216
        %v1147 = vpop.permute.xlu0 %1146
        %v1149 = vmul.f32 %v1147, %v784
        %v1150 = vmul.f32 %v1147, %v780
        %v1151 = vmul.f32 %v1147, %v785
        %1155 = vrot.lane.b32.xlu0 %v1149, 96
        %v1156 = vpop.permute.xlu0 %1155
        %1157 = vrot.lane.b32.xlu0 %v1150, 96
        %v1158 = vpop.permute.xlu0 %1157
        %1159 = vrot.lane.b32.xlu0 %v1151, 96
        %v1160 = vpop.permute.xlu0 %1159
        %v1161 = vsel %vm1072, %v1156, %v1158
        %v1162 = vsel %vm1072, %v1158, %v1160
        %v1165 = vadd.f32 %v1077, %v1161
        %v1166 = vadd.f32 %v1078, %v1162
        %1167 = vset.pattern.permute.xlu0 19
        %1168 = vperm.xlu0 %1167, %v216
        %v1169 = vpop.permute.xlu0 %1168
        %v1171 = vmul.f32 %v1169, %v813
        %v1172 = vmul.f32 %v1169, %v809
        %v1173 = vmul.f32 %v1169, %v814
        %1177 = vrot.lane.b32.xlu0 %v1171, 96
        %v1178 = vpop.permute.xlu0 %1177
        %1179 = vrot.lane.b32.xlu0 %v1172, 96
        %v1180 = vpop.permute.xlu0 %1179
        %1181 = vrot.lane.b32.xlu0 %v1173, 96
        %v1182 = vpop.permute.xlu0 %1181
        %v1183 = vsel %vm1072, %v1178, %v1180
        %v1184 = vsel %vm1072, %v1180, %v1182
        %v1187 = vadd.f32 %v1099, %v1183
        %v1188 = vadd.f32 %v1100, %v1184
        %1189 = vset.pattern.permute.xlu0 20
        %1190 = vperm.xlu0 %1189, %v216
        %v1191 = vpop.permute.xlu0 %1190
        %v1193 = vmul.f32 %v1191, %v842
        %v1194 = vmul.f32 %v1191, %v838
        %v1195 = vmul.f32 %v1191, %v843
        %1199 = vrot.lane.b32.xlu0 %v1193, 96
        %v1200 = vpop.permute.xlu0 %1199
        %1201 = vrot.lane.b32.xlu0 %v1194, 96
        %v1202 = vpop.permute.xlu0 %1201
        %1203 = vrot.lane.b32.xlu0 %v1195, 96
        %v1204 = vpop.permute.xlu0 %1203
        %v1205 = vsel %vm1072, %v1200, %v1202
        %v1206 = vsel %vm1072, %v1202, %v1204
        %v1209 = vadd.f32 %v1121, %v1205
        %v1210 = vadd.f32 %v1122, %v1206
        %1211 = vset.pattern.permute.xlu0 21
        %1212 = vperm.xlu0 %1211, %v216
        %v1213 = vpop.permute.xlu0 %1212
        %v1215 = vmul.f32 %v1213, %v666
        %v1216 = vmul.f32 %v1213, %v662
        %v1217 = vmul.f32 %v1213, %v667
        %1221 = vrot.lane.b32.xlu0 %v1215, 80
        %v1222 = vpop.permute.xlu0 %1221
        %1223 = vrot.lane.b32.xlu0 %v1216, 80
        %v1224 = vpop.permute.xlu0 %1223
        %1225 = vrot.lane.b32.xlu0 %v1217, 80
        %v1226 = vpop.permute.xlu0 %1225
        %vm1227 = vcmask 654336
        %v1228 = vsel %vm1227, %v1222, %v1224
        %v1229 = vsel %vm1227, %v1224, %v1226
        %v1232 = vadd.f32 %v1143, %v1228
        %v1233 = vadd.f32 %v1144, %v1229
        %1234 = vset.pattern.permute.xlu0 22
        %1235 = vperm.xlu0 %1234, %v216
        %v1236 = vpop.permute.xlu0 %1235
        %v1238 = vmul.f32 %v1236, %v697
        %v1239 = vmul.f32 %v1236, %v693
        %v1240 = vmul.f32 %v1236, %v698
        %1244 = vrot.lane.b32.xlu0 %v1238, 80
        %v1245 = vpop.permute.xlu0 %1244
        %1246 = vrot.lane.b32.xlu0 %v1239, 80
        %v1247 = vpop.permute.xlu0 %1246
        %1248 = vrot.lane.b32.xlu0 %v1240, 80
        %v1249 = vpop.permute.xlu0 %1248
        %v1250 = vsel %vm1227, %v1245, %v1247
        %v1251 = vsel %vm1227, %v1247, %v1249
        %v1254 = vadd.f32 %v1165, %v1250
        %v1255 = vadd.f32 %v1166, %v1251
        %1256 = vset.pattern.permute.xlu0 23
        %1257 = vperm.xlu0 %1256, %v216
        %v1258 = vpop.permute.xlu0 %1257
        %v1260 = vmul.f32 %v1258, %v726
        %v1261 = vmul.f32 %v1258, %v722
        %v1262 = vmul.f32 %v1258, %v727
        %1266 = vrot.lane.b32.xlu0 %v1260, 80
        %v1267 = vpop.permute.xlu0 %1266
        %1268 = vrot.lane.b32.xlu0 %v1261, 80
        %v1269 = vpop.permute.xlu0 %1268
        %1270 = vrot.lane.b32.xlu0 %v1262, 80
        %v1271 = vpop.permute.xlu0 %1270
        %v1272 = vsel %vm1227, %v1267, %v1269
        %v1273 = vsel %vm1227, %v1269, %v1271
        %v1276 = vadd.f32 %v1187, %v1272
        %v1277 = vadd.f32 %v1188, %v1273
        %1278 = vset.pattern.permute.xlu0 24
        %1279 = vperm.xlu0 %1278, %v216
        %v1280 = vpop.permute.xlu0 %1279
        %v1282 = vmul.f32 %v1280, %v755
        %v1283 = vmul.f32 %v1280, %v751
        %v1284 = vmul.f32 %v1280, %v756
        %1288 = vrot.lane.b32.xlu0 %v1282, 80
        %v1289 = vpop.permute.xlu0 %1288
        %1290 = vrot.lane.b32.xlu0 %v1283, 80
        %v1291 = vpop.permute.xlu0 %1290
        %1292 = vrot.lane.b32.xlu0 %v1284, 80
        %v1293 = vpop.permute.xlu0 %1292
        %v1294 = vsel %vm1227, %v1289, %v1291
        %v1295 = vsel %vm1227, %v1291, %v1293
        %v1298 = vadd.f32 %v1209, %v1294
        %v1299 = vadd.f32 %v1210, %v1295
        %1300 = vset.pattern.permute.xlu0 25
        %1301 = vperm.xlu0 %1300, %v216
        %v1302 = vpop.permute.xlu0 %1301
        %v1304 = vmul.f32 %v1302, %v784
        %v1305 = vmul.f32 %v1302, %v780
        %v1306 = vmul.f32 %v1302, %v785
        %1310 = vrot.lane.b32.xlu0 %v1304, 80
        %v1311 = vpop.permute.xlu0 %1310
        %1312 = vrot.lane.b32.xlu0 %v1305, 80
        %v1313 = vpop.permute.xlu0 %1312
        %1314 = vrot.lane.b32.xlu0 %v1306, 80
        %v1315 = vpop.permute.xlu0 %1314
        %v1316 = vsel %vm1227, %v1311, %v1313
        %v1317 = vsel %vm1227, %v1313, %v1315
        %v1320 = vadd.f32 %v1232, %v1316
        %v1321 = vadd.f32 %v1233, %v1317
        %1322 = vset.pattern.permute.xlu0 26
        %1323 = vperm.xlu0 %1322, %v216
        %v1324 = vpop.permute.xlu0 %1323
        %v1326 = vmul.f32 %v1324, %v813
        %v1327 = vmul.f32 %v1324, %v809
        %v1328 = vmul.f32 %v1324, %v814
        %1332 = vrot.lane.b32.xlu0 %v1326, 80
        %v1333 = vpop.permute.xlu0 %1332
        %1334 = vrot.lane.b32.xlu0 %v1327, 80
        %v1335 = vpop.permute.xlu0 %1334
        %1336 = vrot.lane.b32.xlu0 %v1328, 80
        %v1337 = vpop.permute.xlu0 %1336
        %v1338 = vsel %vm1227, %v1333, %v1335
        %v1339 = vsel %vm1227, %v1335, %v1337
        %v1342 = vadd.f32 %v1254, %v1338
        %v1343 = vadd.f32 %v1255, %v1339
        %1344 = vset.pattern.permute.xlu0 27
        %1345 = vperm.xlu0 %1344, %v216
        %v1346 = vpop.permute.xlu0 %1345
        %v1348 = vmul.f32 %v1346, %v842
        %v1349 = vmul.f32 %v1346, %v838
        %v1350 = vmul.f32 %v1346, %v843
        %1354 = vrot.lane.b32.xlu0 %v1348, 80
        %v1355 = vpop.permute.xlu0 %1354
        %1356 = vrot.lane.b32.xlu0 %v1349, 80
        %v1357 = vpop.permute.xlu0 %1356
        %1358 = vrot.lane.b32.xlu0 %v1350, 80
        %v1359 = vpop.permute.xlu0 %1358
        %v1360 = vsel %vm1227, %v1355, %v1357
        %v1361 = vsel %vm1227, %v1357, %v1359
        %v1364 = vadd.f32 %v1276, %v1360
        %v1365 = vadd.f32 %v1277, %v1361
        %1366 = vset.pattern.permute.xlu0 28
        %1367 = vperm.xlu0 %1366, %v216
        %v1368 = vpop.permute.xlu0 %1367
        %v1370 = vmul.f32 %v1368, %v666
        %v1371 = vmul.f32 %v1368, %v662
        %v1372 = vmul.f32 %v1368, %v667
        %1376 = vrot.lane.b32.xlu0 %v1370, 64
        %v1377 = vpop.permute.xlu0 %1376
        %1378 = vrot.lane.b32.xlu0 %v1371, 64
        %v1379 = vpop.permute.xlu0 %1378
        %1380 = vrot.lane.b32.xlu0 %v1372, 64
        %v1381 = vpop.permute.xlu0 %1380
        %vm1382 = vcmask 523264
        %v1383 = vsel %vm1382, %v1377, %v1379
        %v1384 = vsel %vm1382, %v1379, %v1381
        %v1387 = vadd.f32 %v1298, %v1383
        %v1388 = vadd.f32 %v1299, %v1384
        %1389 = vset.pattern.permute.xlu0 29
        %1390 = vperm.xlu0 %1389, %v216
        %v1391 = vpop.permute.xlu0 %1390
        %v1393 = vmul.f32 %v1391, %v697
        %v1394 = vmul.f32 %v1391, %v693
        %v1395 = vmul.f32 %v1391, %v698
        %1399 = vrot.lane.b32.xlu0 %v1393, 64
        %v1400 = vpop.permute.xlu0 %1399
        %1401 = vrot.lane.b32.xlu0 %v1394, 64
        %v1402 = vpop.permute.xlu0 %1401
        %1403 = vrot.lane.b32.xlu0 %v1395, 64
        %v1404 = vpop.permute.xlu0 %1403
        %v1405 = vsel %vm1382, %v1400, %v1402
        %v1406 = vsel %vm1382, %v1402, %v1404
        %v1409 = vadd.f32 %v1320, %v1405
        %v1410 = vadd.f32 %v1321, %v1406
        %1411 = vset.pattern.permute.xlu0 30
        %1412 = vperm.xlu0 %1411, %v216
        %v1413 = vpop.permute.xlu0 %1412
        %v1415 = vmul.f32 %v1413, %v726
        %v1416 = vmul.f32 %v1413, %v722
        %v1417 = vmul.f32 %v1413, %v727
        %1421 = vrot.lane.b32.xlu0 %v1415, 64
        %v1422 = vpop.permute.xlu0 %1421
        %1423 = vrot.lane.b32.xlu0 %v1416, 64
        %v1424 = vpop.permute.xlu0 %1423
        %1425 = vrot.lane.b32.xlu0 %v1417, 64
        %v1426 = vpop.permute.xlu0 %1425
        %v1427 = vsel %vm1382, %v1422, %v1424
        %v1428 = vsel %vm1382, %v1424, %v1426
        %v1431 = vadd.f32 %v1342, %v1427
        %v1432 = vadd.f32 %v1343, %v1428
        %1433 = vset.pattern.permute.xlu0 31
        %1434 = vperm.xlu0 %1433, %v216
        %v1435 = vpop.permute.xlu0 %1434
        %v1437 = vmul.f32 %v1435, %v755
        %v1438 = vmul.f32 %v1435, %v751
        %v1439 = vmul.f32 %v1435, %v756
        %1443 = vrot.lane.b32.xlu0 %v1437, 64
        %v1444 = vpop.permute.xlu0 %1443
        %1445 = vrot.lane.b32.xlu0 %v1438, 64
        %v1446 = vpop.permute.xlu0 %1445
        %1447 = vrot.lane.b32.xlu0 %v1439, 64
        %v1448 = vpop.permute.xlu0 %1447
        %v1449 = vsel %vm1382, %v1444, %v1446
        %v1450 = vsel %vm1382, %v1446, %v1448
        %v1453 = vadd.f32 %v1364, %v1449
        %v1454 = vadd.f32 %v1365, %v1450
        %1455 = vset.pattern.permute.xlu0 32
        %1456 = vperm.xlu0 %1455, %v216
        %v1457 = vpop.permute.xlu0 %1456
        %v1459 = vmul.f32 %v1457, %v784
        %v1460 = vmul.f32 %v1457, %v780
        %v1461 = vmul.f32 %v1457, %v785
        %1465 = vrot.lane.b32.xlu0 %v1459, 64
        %v1466 = vpop.permute.xlu0 %1465
        %1467 = vrot.lane.b32.xlu0 %v1460, 64
        %v1468 = vpop.permute.xlu0 %1467
        %1469 = vrot.lane.b32.xlu0 %v1461, 64
        %v1470 = vpop.permute.xlu0 %1469
        %v1471 = vsel %vm1382, %v1466, %v1468
        %v1472 = vsel %vm1382, %v1468, %v1470
        %v1475 = vadd.f32 %v1387, %v1471
        %v1476 = vadd.f32 %v1388, %v1472
        %1477 = vset.pattern.permute.xlu0 33
        %1478 = vperm.xlu0 %1477, %v216
        %v1479 = vpop.permute.xlu0 %1478
        %v1481 = vmul.f32 %v1479, %v813
        %v1482 = vmul.f32 %v1479, %v809
        %v1483 = vmul.f32 %v1479, %v814
        %1487 = vrot.lane.b32.xlu0 %v1481, 64
        %v1488 = vpop.permute.xlu0 %1487
        %1489 = vrot.lane.b32.xlu0 %v1482, 64
        %v1490 = vpop.permute.xlu0 %1489
        %1491 = vrot.lane.b32.xlu0 %v1483, 64
        %v1492 = vpop.permute.xlu0 %1491
        %v1493 = vsel %vm1382, %v1488, %v1490
        %v1494 = vsel %vm1382, %v1490, %v1492
        %v1497 = vadd.f32 %v1409, %v1493
        %v1498 = vadd.f32 %v1410, %v1494
        %1499 = vset.pattern.permute.xlu0 34
        %1500 = vperm.xlu0 %1499, %v216
        %v1501 = vpop.permute.xlu0 %1500
        %v1503 = vmul.f32 %v1501, %v842
        %v1504 = vmul.f32 %v1501, %v838
        %v1505 = vmul.f32 %v1501, %v843
        %1509 = vrot.lane.b32.xlu0 %v1503, 64
        %v1510 = vpop.permute.xlu0 %1509
        %1511 = vrot.lane.b32.xlu0 %v1504, 64
        %v1512 = vpop.permute.xlu0 %1511
        %1513 = vrot.lane.b32.xlu0 %v1505, 64
        %v1514 = vpop.permute.xlu0 %1513
        %v1515 = vsel %vm1382, %v1510, %v1512
        %v1516 = vsel %vm1382, %v1512, %v1514
        %v1519 = vadd.f32 %v1431, %v1515
        %v1520 = vadd.f32 %v1432, %v1516
        %1521 = vset.pattern.permute.xlu0 35
        %1522 = vperm.xlu0 %1521, %v216
        %v1523 = vpop.permute.xlu0 %1522
        %v1525 = vmul.f32 %v1523, %v666
        %v1526 = vmul.f32 %v1523, %v662
        %v1527 = vmul.f32 %v1523, %v667
        %1531 = vrot.lane.b32.xlu0 %v1525, 48
        %v1532 = vpop.permute.xlu0 %1531
        %1533 = vrot.lane.b32.xlu0 %v1526, 48
        %v1534 = vpop.permute.xlu0 %1533
        %1535 = vrot.lane.b32.xlu0 %v1527, 48
        %v1536 = vpop.permute.xlu0 %1535
        %v1537 = vsel %vm661, %v1532, %v1534
        %v1538 = vsel %vm661, %v1534, %v1536
        %v1541 = vadd.f32 %v1453, %v1537
        %v1542 = vadd.f32 %v1454, %v1538
        %1543 = vset.pattern.permute.xlu0 36
        %1544 = vperm.xlu0 %1543, %v216
        %v1545 = vpop.permute.xlu0 %1544
        %v1547 = vmul.f32 %v1545, %v697
        %v1548 = vmul.f32 %v1545, %v693
        %v1549 = vmul.f32 %v1545, %v698
        %1553 = vrot.lane.b32.xlu0 %v1547, 48
        %v1554 = vpop.permute.xlu0 %1553
        %1555 = vrot.lane.b32.xlu0 %v1548, 48
        %v1556 = vpop.permute.xlu0 %1555
        %1557 = vrot.lane.b32.xlu0 %v1549, 48
        %v1558 = vpop.permute.xlu0 %1557
        %v1559 = vsel %vm661, %v1554, %v1556
        %v1560 = vsel %vm661, %v1556, %v1558
        %v1563 = vadd.f32 %v1475, %v1559
        %v1564 = vadd.f32 %v1476, %v1560
        %1565 = vset.pattern.permute.xlu0 37
        %1566 = vperm.xlu0 %1565, %v216
        %v1567 = vpop.permute.xlu0 %1566
        %v1569 = vmul.f32 %v1567, %v726
        %v1570 = vmul.f32 %v1567, %v722
        %v1571 = vmul.f32 %v1567, %v727
        %1575 = vrot.lane.b32.xlu0 %v1569, 48
        %v1576 = vpop.permute.xlu0 %1575
        %1577 = vrot.lane.b32.xlu0 %v1570, 48
        %v1578 = vpop.permute.xlu0 %1577
        %1579 = vrot.lane.b32.xlu0 %v1571, 48
        %v1580 = vpop.permute.xlu0 %1579
        %v1581 = vsel %vm661, %v1576, %v1578
        %v1582 = vsel %vm661, %v1578, %v1580
        %v1585 = vadd.f32 %v1497, %v1581
        %v1586 = vadd.f32 %v1498, %v1582
        %1587 = vset.pattern.permute.xlu0 38
        %1588 = vperm.xlu0 %1587, %v216
        %v1589 = vpop.permute.xlu0 %1588
        %v1591 = vmul.f32 %v1589, %v755
        %v1592 = vmul.f32 %v1589, %v751
        %v1593 = vmul.f32 %v1589, %v756
        %1597 = vrot.lane.b32.xlu0 %v1591, 48
        %v1598 = vpop.permute.xlu0 %1597
        %1599 = vrot.lane.b32.xlu0 %v1592, 48
        %v1600 = vpop.permute.xlu0 %1599
        %1601 = vrot.lane.b32.xlu0 %v1593, 48
        %v1602 = vpop.permute.xlu0 %1601
        %v1603 = vsel %vm661, %v1598, %v1600
        %v1604 = vsel %vm661, %v1600, %v1602
        %v1607 = vadd.f32 %v1519, %v1603
        %v1608 = vadd.f32 %v1520, %v1604
        %1609 = vset.pattern.permute.xlu0 39
        %1610 = vperm.xlu0 %1609, %v216
        %v1611 = vpop.permute.xlu0 %1610
        %v1613 = vmul.f32 %v1611, %v784
        %v1614 = vmul.f32 %v1611, %v780
        %v1615 = vmul.f32 %v1611, %v785
        %1619 = vrot.lane.b32.xlu0 %v1613, 48
        %v1620 = vpop.permute.xlu0 %1619
        %1621 = vrot.lane.b32.xlu0 %v1614, 48
        %v1622 = vpop.permute.xlu0 %1621
        %1623 = vrot.lane.b32.xlu0 %v1615, 48
        %v1624 = vpop.permute.xlu0 %1623
        %v1625 = vsel %vm661, %v1620, %v1622
        %v1626 = vsel %vm661, %v1622, %v1624
        %v1629 = vadd.f32 %v1541, %v1625
        %v1630 = vadd.f32 %v1542, %v1626
        %1631 = vset.pattern.permute.xlu0 40
        %1632 = vperm.xlu0 %1631, %v216
        %v1633 = vpop.permute.xlu0 %1632
        %v1635 = vmul.f32 %v1633, %v813
        %v1636 = vmul.f32 %v1633, %v809
        %v1637 = vmul.f32 %v1633, %v814
        %1641 = vrot.lane.b32.xlu0 %v1635, 48
        %v1642 = vpop.permute.xlu0 %1641
        %1643 = vrot.lane.b32.xlu0 %v1636, 48
        %v1644 = vpop.permute.xlu0 %1643
        %1645 = vrot.lane.b32.xlu0 %v1637, 48
        %v1646 = vpop.permute.xlu0 %1645
        %v1647 = vsel %vm661, %v1642, %v1644
        %v1648 = vsel %vm661, %v1644, %v1646
        %v1651 = vadd.f32 %v1563, %v1647
        %v1652 = vadd.f32 %v1564, %v1648
        %1653 = vset.pattern.permute.xlu0 41
        %1654 = vperm.xlu0 %1653, %v216
        %v1655 = vpop.permute.xlu0 %1654
        %v1657 = vmul.f32 %v1655, %v842
        %v1658 = vmul.f32 %v1655, %v838
        %v1659 = vmul.f32 %v1655, %v843
        %1663 = vrot.lane.b32.xlu0 %v1657, 48
        %v1664 = vpop.permute.xlu0 %1663
        %1665 = vrot.lane.b32.xlu0 %v1658, 48
        %v1666 = vpop.permute.xlu0 %1665
        %1667 = vrot.lane.b32.xlu0 %v1659, 48
        %v1668 = vpop.permute.xlu0 %1667
        %v1669 = vsel %vm661, %v1664, %v1666
        %v1670 = vsel %vm661, %v1666, %v1668
        %v1673 = vadd.f32 %v1585, %v1669
        %v1674 = vadd.f32 %v1586, %v1670
        %1675 = vset.pattern.permute.xlu0 42
        %1676 = vperm.xlu0 %1675, %v216
        %v1677 = vpop.permute.xlu0 %1676
        %v1679 = vmul.f32 %v1677, %v666
        %v1680 = vmul.f32 %v1677, %v662
        %v1681 = vmul.f32 %v1677, %v667
        %1685 = vrot.lane.b32.xlu0 %v1679, 32
        %v1686 = vpop.permute.xlu0 %1685
        %1687 = vrot.lane.b32.xlu0 %v1680, 32
        %v1688 = vpop.permute.xlu0 %1687
        %1689 = vrot.lane.b32.xlu0 %v1681, 32
        %v1690 = vpop.permute.xlu0 %1689
        %v1691 = vsel %vm340, %v1686, %v1688
        %v1692 = vsel %vm340, %v1688, %v1690
        %v1695 = vadd.f32 %v1607, %v1691
        %v1696 = vadd.f32 %v1608, %v1692
        %1697 = vset.pattern.permute.xlu0 43
        %1698 = vperm.xlu0 %1697, %v216
        %v1699 = vpop.permute.xlu0 %1698
        %v1701 = vmul.f32 %v1699, %v697
        %v1702 = vmul.f32 %v1699, %v693
        %v1703 = vmul.f32 %v1699, %v698
        %1707 = vrot.lane.b32.xlu0 %v1701, 32
        %v1708 = vpop.permute.xlu0 %1707
        %1709 = vrot.lane.b32.xlu0 %v1702, 32
        %v1710 = vpop.permute.xlu0 %1709
        %1711 = vrot.lane.b32.xlu0 %v1703, 32
        %v1712 = vpop.permute.xlu0 %1711
        %v1713 = vsel %vm340, %v1708, %v1710
        %v1714 = vsel %vm340, %v1710, %v1712
        %v1717 = vadd.f32 %v1629, %v1713
        %v1718 = vadd.f32 %v1630, %v1714
        %1719 = vset.pattern.permute.xlu0 44
        %1720 = vperm.xlu0 %1719, %v216
        %v1721 = vpop.permute.xlu0 %1720
        %v1723 = vmul.f32 %v1721, %v726
        %v1724 = vmul.f32 %v1721, %v722
        %v1725 = vmul.f32 %v1721, %v727
        %1729 = vrot.lane.b32.xlu0 %v1723, 32
        %v1730 = vpop.permute.xlu0 %1729
        %1731 = vrot.lane.b32.xlu0 %v1724, 32
        %v1732 = vpop.permute.xlu0 %1731
        %1733 = vrot.lane.b32.xlu0 %v1725, 32
        %v1734 = vpop.permute.xlu0 %1733
        %v1735 = vsel %vm340, %v1730, %v1732
        %v1736 = vsel %vm340, %v1732, %v1734
        %v1739 = vadd.f32 %v1651, %v1735
        %v1740 = vadd.f32 %v1652, %v1736
        %1741 = vset.pattern.permute.xlu0 45
        %1742 = vperm.xlu0 %1741, %v216
        %v1743 = vpop.permute.xlu0 %1742
        %v1745 = vmul.f32 %v1743, %v755
        %v1746 = vmul.f32 %v1743, %v751
        %v1747 = vmul.f32 %v1743, %v756
        %1751 = vrot.lane.b32.xlu0 %v1745, 32
        %v1752 = vpop.permute.xlu0 %1751
        %1753 = vrot.lane.b32.xlu0 %v1746, 32
        %v1754 = vpop.permute.xlu0 %1753
        %1755 = vrot.lane.b32.xlu0 %v1747, 32
        %v1756 = vpop.permute.xlu0 %1755
        %v1757 = vsel %vm340, %v1752, %v1754
        %v1758 = vsel %vm340, %v1754, %v1756
        %v1761 = vadd.f32 %v1673, %v1757
        %v1762 = vadd.f32 %v1674, %v1758
        %1763 = vset.pattern.permute.xlu0 46
        %1764 = vperm.xlu0 %1763, %v216
        %v1765 = vpop.permute.xlu0 %1764
        %v1767 = vmul.f32 %v1765, %v784
        %v1768 = vmul.f32 %v1765, %v780
        %v1769 = vmul.f32 %v1765, %v785
        %1773 = vrot.lane.b32.xlu0 %v1767, 32
        %v1774 = vpop.permute.xlu0 %1773
        %1775 = vrot.lane.b32.xlu0 %v1768, 32
        %v1776 = vpop.permute.xlu0 %1775
        %1777 = vrot.lane.b32.xlu0 %v1769, 32
        %v1778 = vpop.permute.xlu0 %1777
        %v1779 = vsel %vm340, %v1774, %v1776
        %v1780 = vsel %vm340, %v1776, %v1778
        %v1783 = vadd.f32 %v1695, %v1779
        %v1784 = vadd.f32 %v1696, %v1780
        %1785 = vset.pattern.permute.xlu0 47
        %1786 = vperm.xlu0 %1785, %v216
        %v1787 = vpop.permute.xlu0 %1786
        %v1789 = vmul.f32 %v1787, %v813
        %v1790 = vmul.f32 %v1787, %v809
        %v1791 = vmul.f32 %v1787, %v814
        %1795 = vrot.lane.b32.xlu0 %v1789, 32
        %v1796 = vpop.permute.xlu0 %1795
        %1797 = vrot.lane.b32.xlu0 %v1790, 32
        %v1798 = vpop.permute.xlu0 %1797
        %1799 = vrot.lane.b32.xlu0 %v1791, 32
        %v1800 = vpop.permute.xlu0 %1799
        %v1801 = vsel %vm340, %v1796, %v1798
        %v1802 = vsel %vm340, %v1798, %v1800
        %v1805 = vadd.f32 %v1717, %v1801
        %v1806 = vadd.f32 %v1718, %v1802
        %1807 = vset.pattern.permute.xlu0 48
        %1808 = vperm.xlu0 %1807, %v216
        %v1809 = vpop.permute.xlu0 %1808
        %v1811 = vmul.f32 %v1809, %v842
        %v1812 = vmul.f32 %v1809, %v838
        %v1813 = vmul.f32 %v1809, %v843
        %1817 = vrot.lane.b32.xlu0 %v1811, 32
        %v1818 = vpop.permute.xlu0 %1817
        %1819 = vrot.lane.b32.xlu0 %v1812, 32
        %v1820 = vpop.permute.xlu0 %1819
        %1821 = vrot.lane.b32.xlu0 %v1813, 32
        %v1822 = vpop.permute.xlu0 %1821
        %v1823 = vsel %vm340, %v1818, %v1820
        %v1824 = vsel %vm340, %v1820, %v1822
        %v1827 = vadd.f32 %v1739, %v1823
        %v1828 = vadd.f32 %v1740, %v1824
        %v1829 = vadd.f32 %v1827, %v1761
        %v1830 = vadd.f32 %v1828, %v1762
        %v1831 = vadd.f32 %v1829, %v1783
        %v1832 = vadd.f32 %v1830, %v1784
        %v1833 = vadd.f32 %v1831, %v1805
        %v1834 = vadd.f32 %v1832, %v1806
        %v1837 = vrot.slane %v1833, 1
        %v1838 = vrot.slane %v1834, 1
        %v1841 = vadd.f32 %v1833, %v1837
        %v1842 = vadd.f32 %v1834, %v1838
        %v1843 = vxor.u32 %v1841, 2147483648
        %v1844 = vxor.u32 %v1842, 2147483648
        %v1845 = vmul.f32 %v1843, 1.442695
        %v1846 = vpow.pop %v1845
        %v1847 = vmul.f32 %v1844, 1.442695
        %v1848 = vpow.pop %v1847
        %v1849 = vadd.f32 %v1846, 1.0
        %v1850 = vadd.f32 %v1848, 1.0
        %v1851 = vrcp.pop %v1849
        %v1852 = vmul.f32 1.0, %v1851
        %v1853 = vrcp.pop %v1850
        %v1854 = vmul.f32 1.0, %v1853
        %v1855 = vlaneseq
        %v1856 = vshrl.u32 %v1855, 7
        %v1857 = vsub.s32 0, %v1856
        %v1858 = vrot.slane %v1852, %v1857
        %v1859 = vlaneseq
        %v1860 = vshrl.u32 %v1859, 7
        %v1861 = vsub.s32 0, %v1860
        %v1862 = vrot.slane %v1854, %v1861
        %v1863 = vmul.f32 %v585, %v1858
        %v1864 = vmul.f32 %v586, %v1862
        %v1865 = vmul.f32 %v587, %v1858
        %v1866 = vmul.f32 %v588, %v1862
        %v1867 = vmul.f32 %v589, %v1858
        %v1868 = vmul.f32 %v590, %v1862
        %v1869 = vmul.f32 %v591, %v1858
        %v1870 = vmul.f32 %v592, %v1862
        %1871 = vst [vmem:[%s215] sm:$0xff] %v1863
        %1872 = vst [vmem:[%s215 + $0x8] sm:$0xff] %v1864
        %1873 = vst [vmem:[%s215 + $0x10] sm:$0xff] %v1865
        %1874 = vst [vmem:[%s215 + $0x18] sm:$0xff] %v1866
        %1875 = vst [vmem:[%s215 + $0x20] sm:$0xff] %v1867
        %1876 = vst [vmem:[%s215 + $0x28] sm:$0xff] %v1868
        %1877 = vst [vmem:[%s215 + $0x30] sm:$0xff] %v1869
        %1878 = vst [vmem:[%s215 + $0x38] sm:$0xff] %v1870
        %s1879 = sand.u32 %s118, 1
        %s1880 = scalar_lea.sflag [#allocation4], %s1879
        %s1881 = sand.u32 %s118, 1
        %s1882 = smul.addr %s1881, 64
        %s1883 = scalar_lea.vmem [#allocation5], %s1882
        // Predicated region
        $region41: #{tpu_custom_call.1} parent=35 // pred_check
          %p1884 = pneg %p128
        $region42: #{tpu_custom_call.1} parent=35 // pred_check_branch
          %1886 = sbr.rel (%p1884) target = $region44
        $region43: #{tpu_custom_call.1} parent=35 // pred_region
          %s1888 = ssub.s32 1024, 1024
          %1889 = vsyncadd %s1880, %s1888
          %s1890 = smul.addr %s21, 8
          %s1891 = smul.addr %s1890, 128
          %s1892 = scalar_lea.hbm %s4, %s1891
          %s1893 = sshll.u32 %s1883, 4
          %s1894 = int_to_ptr.vmem [resolvable:$true] %s1893
          %1899 = dma.vmem_to_hbm [thread:$0]  %s1894, 1024, %s1892, %s1880, 256, 256, 16
        $region44: #{tpu_custom_call.1} parent=35 // pred_fallthru
          _
      $region36: #{tpu_custom_call.1} parent=5 // pred_fallthru
        _
      %p1900 = scmp.le.s32.totalorder 2, %s16
      // Predicated region
      $region45: #{tpu_custom_call.1} parent=5 // pred_check
        %p1901 = pneg %p1900
      $region46: #{tpu_custom_call.1} parent=5 // pred_check_branch
        %1903 = sbr.rel (%p1901) target = $region48
      $region47: #{tpu_custom_call.1} parent=5 // pred_region
        %s1904 = ssub.s32 %s16, 2
        // Predicated region
        $region49: #{tpu_custom_call.1} parent=47 // pred_check
          %p1905 = pneg %p134
        $region50: #{tpu_custom_call.1} parent=47 // pred_check_branch
          %1907 = sbr.rel (%p1905) target = $region52
        $region51: #{tpu_custom_call.1} parent=47 // pred_region
          %s1908 = sand.u32 %s119, 1
          %s1909 = scalar_lea.sflag [#allocation4], %s1908
          %s1910 = sand.u32 %s119, 1
          %s1911 = smul.addr %s1910, 64
          %s1912 = scalar_lea.vmem [#allocation5], %s1911
          %1913 = dma.done %s1909, 1024
        $region52: #{tpu_custom_call.1} parent=47 // pred_fallthru
          _
      $region48: #{tpu_custom_call.1} parent=5 // pred_fallthru
        _
    $region6: #{tpu_custom_call.1} parent=1 // loop_footer
      %s20 = sadd.s32 1, %s16
    $region7: #{tpu_custom_call.1} parent=1 // loop_footer_branch
      %15 = sbr.rel target = $region3
    $region8: #{tpu_custom_call.1} parent=1 // loop_exit
      _
    %1914 = vsyncpa [#allocation3], 1
    %s1915 = scalar_lea.sflag [#allocation3], 1
    %1916 = vsyncpa %s1915, 1
    %1917 = vsyncpa [#allocation4], 1
    %s1918 = scalar_lea.sflag [#allocation4], 1
    %1919 = vsyncpa %s1918, 1

</llo_original>
